<compile_context>
chip_gen: v5e
topology: v5e:2x2
jax: 0.10.0
libtpu: 0.0.40
codegen_flags: <defaults>
</compile_context>

<pallas_src>
import math
import functools

import jax
import jax.numpy as jnp
from jax.experimental import pallas as pl
from jax.experimental.pallas import tpu as pltpu

K_IN = 368            # PyTorch feature dim
HID = 512
N_ACT = 6


def _cdiv(a, b):
    return -(-a // b)


def _round_up(x, m):
    return _cdiv(x, m) * m


def _choose_tiling(B, tb):
    """Pick batch tile TB (multiple of 8) and padded batch Bp = nt * TB.

    Balanced tiles keep padding waste to < 8 rows per tile (B=300 -> 2x152
    instead of 2x256), and batches with enough work are forced onto >= 2 grid
    steps so v7x's two TensorCores both get a share of the batch.
    """
    B8 = _round_up(B, 8)
    nt = _cdiv(B8, tb)
    if B8 >= 256:                 # enough work to be worth splitting across 2 TCs
        nt = max(nt, 2)
    TB = _round_up(_cdiv(B8, nt), 8)
    nt = _cdiv(B8, TB)
    return TB, nt * TB


def dqn_kernel(x_ref,
               w1_ref, b1_ref,
               w2_ref, b2_ref,
               w3_ref, b3_ref,
               wh_ref, bh_ref,
               q_ref):
    # fused cast: raw f32 activations -> bf16 on the VPU (no host-side pass)
    x = x_ref[...].astype(jnp.bfloat16)
    # fc1 + ReLU (bf16 operands on the MXU, f32 accumulation, f32 bias/ReLU)
    h = jnp.dot(x, w1_ref[...], preferred_element_type=jnp.float32)
    h = jnp.maximum(h + b1_ref[...], 0.0).astype(jnp.bfloat16)
    # fc2 + ReLU
    h = jnp.dot(h, w2_ref[...], preferred_element_type=jnp.float32)
    h = jnp.maximum(h + b2_ref[...], 0.0).astype(jnp.bfloat16)
    # fc3 + ReLU
    h = jnp.dot(h, w3_ref[...], preferred_element_type=jnp.float32)
    h = jnp.maximum(h + b3_ref[...], 0.0).astype(jnp.bfloat16)
    # dueling head folded into a single [HID, 6] matmul: wh = w4 + wv, bh = b4 + bv
    q_ref[...] = (jnp.dot(h, wh_ref[...], preferred_element_type=jnp.float32)
                  + bh_ref[...]).astype(q_ref.dtype)


@functools.partial(jax.jit, static_argnames=("tb",))
def dqn_forward(x, kp, *, tb=1024):
    """x: [B, 368] f32.  kp: packed kernel params (see pack_params)."""
    B = x.shape[0]
    TB, Bp = _choose_tiling(B, tb)
    if Bp != B:
        x = jnp.pad(x, ((0, Bp - B), (0, 0)))   # batch-only pad; a few rows at most
    grid = (Bp // TB,)

    def resident(a):
        # same block index every grid step -> fetched once, stays in VMEM
        return pl.BlockSpec(a.shape, lambda i: (0, 0))

    w1, b1 = kp["w1"], kp["b1"]
    w2, b2 = kp["w2"], kp["b2"]
    w3, b3 = kp["w3"], kp["b3"]
    wh, bh = kp["wh"], kp["bh"]

    q = pl.pallas_call(
        dqn_kernel,
        out_shape=jax.ShapeDtypeStruct((Bp, N_ACT), jnp.float32),
        grid=grid,
        in_specs=[pl.BlockSpec((TB, K_IN), lambda i: (i, 0)),
                  resident(w1), resident(b1),
                  resident(w2), resident(b2),
                  resident(w3), resident(b3),
                  resident(wh), resident(bh)],
        out_specs=pl.BlockSpec((TB, N_ACT), lambda i: (i, 0)),
        compiler_params=pltpu.CompilerParams(
            dimension_semantics=("parallel",),   # v7x: 2 TCs split batch tiles
            vmem_limit_bytes=32 << 20),          # ~12 MiB footprint at TB=1024
    )(x, w1, b1, w2, b2, w3, b3, wh, bh)
    return q[:B]


def init_params(key):
    """Deterministic f32 init mimicking nn.Linear (uniform +/- 1/sqrt(fan_in)).
    Weights are [in_features, out_features] (transpose of PyTorch)."""
    def linear(k, fan_in, fan_out):
        kw, kb = jax.random.split(k)
        bound = 1.0 / math.sqrt(fan_in)
        w = jax.random.uniform(kw, (fan_in, fan_out), jnp.float32, -bound, bound)
        b = jax.random.uniform(kb, (1, fan_out), jnp.float32, -bound, bound)
        return w, b

    k1, k2, k3, k4, kv = jax.random.split(key, 5)
    w1, b1 = linear(k1, K_IN, HID)
    w2, b2 = linear(k2, HID, HID)
    w3, b3 = linear(k3, HID, HID)
    w4, b4 = linear(k4, HID, N_ACT)
    wv, bv = linear(kv, HID, 1)
    return dict(w1=w1, b1=b1, w2=w2, b2=b2, w3=w3, b3=b3,
                w4=w4, b4=b4, wv=wv, bv=bv)


def pack_params(p):
    """f32 nn.Linear-style params -> kernel layout: bf16 weights, dueling
    value branch folded into the action weights (q = a + v exactly)."""
    wh = (p["w4"] + p["wv"]).astype(jnp.bfloat16)   # [512,1] broadcasts over 6 cols
    bh = p["b4"] + p["bv"]
    return dict(w1=p["w1"].astype(jnp.bfloat16), b1=p["b1"],
                w2=p["w2"].astype(jnp.bfloat16), b2=p["b2"],
                w3=p["w3"].astype(jnp.bfloat16), b3=p["b3"],
                wh=wh, bh=bh)


def dqn_reference(x, p):
    """Pure-JAX reference: original (unfused) PyTorch structure with the same
    bf16 weight compression / f32 accumulation as the kernel.  Note the source
    module really computes q = v + a with no advantage-mean subtraction."""
    def dot(a, w):
        return jnp.dot(a.astype(jnp.bfloat16), w.astype(jnp.bfloat16),
                       preferred_element_type=jnp.float32)
    h = jnp.maximum(dot(x, p["w1"]) + p["b1"], 0.0)
    h = jnp.maximum(dot(h, p["w2"]) + p["b2"], 0.0)
    h = jnp.maximum(dot(h, p["w3"]) + p["b3"], 0.0)
    v = dot(h, p["wv"]) + p["bv"]
    a = dot(h, p["w4"]) + p["b4"]
    return v + a                      # dueling=True in the PyTorch module


if __name__ == "__main__":
    key = jax.random.PRNGKey(0)
    kx, kx2, kparam = jax.random.split(key, 3)

    params = init_params(kparam)
    kparams = pack_params(params)

    # small acting-loop batch (single grid step)
    B = 8
    x = jax.random.normal(kx, (B, K_IN), jnp.float32)
    q = jax.block_until_ready(dqn_forward(x, kparams))
    q_ref = dqn_reference(x, params)
    assert q.shape == (B, N_ACT)
    assert jnp.allclose(q, q_ref, atol=5e-3, rtol=5e-3), "mismatch (B=8)"

    # replay-sized batch: exercises the balanced multi-tile / resident-weight path
    B2 = 300
    x2 = jax.random.normal(kx2, (B2, K_IN), jnp.float32)
    q2 = jax.block_until_ready(dqn_forward(x2, kparams))
    q2_ref = dqn_reference(x2, params)
    assert q2.shape == (B2, N_ACT)
    assert jnp.allclose(q2, q2_ref, atol=5e-3, rtol=5e-3), "mismatch (B=300)"

    print("KERNEL_OK")
</pallas_src>

<mosaic_0001>
module attributes {stable_mosaic.version = 11 : i64} {
  func.func @dqn_kernel(%arg0: i32, %arg1: memref<8x368xf32, #tpu.memory_space<vmem>>, %arg2: memref<368x512xbf16, #tpu.memory_space<vmem>>, %arg3: memref<1x512xf32, #tpu.memory_space<vmem>>, %arg4: memref<512x512xbf16, #tpu.memory_space<vmem>>, %arg5: memref<1x512xf32, #tpu.memory_space<vmem>>, %arg6: memref<512x512xbf16, #tpu.memory_space<vmem>>, %arg7: memref<1x512xf32, #tpu.memory_space<vmem>>, %arg8: memref<512x6xbf16, #tpu.memory_space<vmem>>, %arg9: memref<1x6xf32, #tpu.memory_space<vmem>>, %arg10: memref<8x6xf32, #tpu.memory_space<vmem>>) attributes {dimension_semantics = [#tpu.dimension_semantics<parallel>], iteration_bounds = array<i64: 1>, scalar_prefetch = 0 : i64, scratch_operands = 0 : i64, tpu.core_type = #tpu.core_type<tc>, window_params = [{transform_indices = @transform_0, window_bounds = array<i64: 8, 368>}, {pipeline_mode = #tpu.pipeline_mode<synchronous>, transform_indices = @transform_1, window_bounds = array<i64: 368, 512>}, {pipeline_mode = #tpu.pipeline_mode<synchronous>, transform_indices = @transform_2, window_bounds = array<i64: 1, 512>}, {pipeline_mode = #tpu.pipeline_mode<synchronous>, transform_indices = @transform_3, window_bounds = array<i64: 512, 512>}, {pipeline_mode = #tpu.pipeline_mode<synchronous>, transform_indices = @transform_4, window_bounds = array<i64: 1, 512>}, {pipeline_mode = #tpu.pipeline_mode<synchronous>, transform_indices = @transform_5, window_bounds = array<i64: 512, 512>}, {pipeline_mode = #tpu.pipeline_mode<synchronous>, transform_indices = @transform_6, window_bounds = array<i64: 1, 512>}, {pipeline_mode = #tpu.pipeline_mode<synchronous>, transform_indices = @transform_7, window_bounds = array<i64: 512, 6>}, {pipeline_mode = #tpu.pipeline_mode<synchronous>, transform_indices = @transform_8, window_bounds = array<i64: 1, 6>}, {transform_indices = @transform_9, window_bounds = array<i64: 8, 6>}]} {
    %c0 = arith.constant 0 : index
    %c0_0 = arith.constant 0 : index
    %0 = vector.load %arg1[%c0, %c0_0] : memref<8x368xf32, #tpu.memory_space<vmem>>, vector<8x368xf32>
    %1 = arith.truncf %0 : vector<8x368xf32> to vector<8x368xbf16>
    %c0_1 = arith.constant 0 : index
    %c0_2 = arith.constant 0 : index
    %2 = vector.load %arg2[%c0_1, %c0_2] : memref<368x512xbf16, #tpu.memory_space<vmem>>, vector<368x512xbf16>
    %cst = arith.constant dense<0.000000e+00> : vector<8x512xf32>
    %3 = tpu.matmul %1, %2, %cst {dimension_numbers = #tpu.dot_dimension_numbers<[1], [0], [0], [1], [0, 0, 1, 1], [], []>} : vector<8x368xbf16>, vector<368x512xbf16>, vector<8x512xf32> -> vector<8x512xf32>
    %c0_3 = arith.constant 0 : index
    %c0_4 = arith.constant 0 : index
    %4 = vector.load %arg3[%c0_3, %c0_4] : memref<1x512xf32, #tpu.memory_space<vmem>>, vector<1x512xf32>
    %5 = vector.broadcast %4 : vector<1x512xf32> to vector<8x512xf32>
    %6 = arith.addf %3, %5 : vector<8x512xf32>
    %cst_5 = arith.constant 0.000000e+00 : f32
    %7 = vector.broadcast %cst_5 : f32 to vector<8x512xf32>
    %8 = arith.maximumf %6, %7 : vector<8x512xf32>
    %9 = arith.truncf %8 : vector<8x512xf32> to vector<8x512xbf16>
    %c0_6 = arith.constant 0 : index
    %c0_7 = arith.constant 0 : index
    %10 = vector.load %arg4[%c0_6, %c0_7] : memref<512x512xbf16, #tpu.memory_space<vmem>>, vector<512x512xbf16>
    %cst_8 = arith.constant dense<0.000000e+00> : vector<8x512xf32>
    %11 = tpu.matmul %9, %10, %cst_8 {dimension_numbers = #tpu.dot_dimension_numbers<[1], [0], [0], [1], [0, 0, 1, 1], [], []>} : vector<8x512xbf16>, vector<512x512xbf16>, vector<8x512xf32> -> vector<8x512xf32>
    %c0_9 = arith.constant 0 : index
    %c0_10 = arith.constant 0 : index
    %12 = vector.load %arg5[%c0_9, %c0_10] : memref<1x512xf32, #tpu.memory_space<vmem>>, vector<1x512xf32>
    %13 = vector.broadcast %12 : vector<1x512xf32> to vector<8x512xf32>
    %14 = arith.addf %11, %13 : vector<8x512xf32>
    %cst_11 = arith.constant 0.000000e+00 : f32
    %15 = vector.broadcast %cst_11 : f32 to vector<8x512xf32>
    %16 = arith.maximumf %14, %15 : vector<8x512xf32>
    %17 = arith.truncf %16 : vector<8x512xf32> to vector<8x512xbf16>
    %c0_12 = arith.constant 0 : index
    %c0_13 = arith.constant 0 : index
    %18 = vector.load %arg6[%c0_12, %c0_13] : memref<512x512xbf16, #tpu.memory_space<vmem>>, vector<512x512xbf16>
    %cst_14 = arith.constant dense<0.000000e+00> : vector<8x512xf32>
    %19 = tpu.matmul %17, %18, %cst_14 {dimension_numbers = #tpu.dot_dimension_numbers<[1], [0], [0], [1], [0, 0, 1, 1], [], []>} : vector<8x512xbf16>, vector<512x512xbf16>, vector<8x512xf32> -> vector<8x512xf32>
    %c0_15 = arith.constant 0 : index
    %c0_16 = arith.constant 0 : index
    %20 = vector.load %arg7[%c0_15, %c0_16] : memref<1x512xf32, #tpu.memory_space<vmem>>, vector<1x512xf32>
    %21 = vector.broadcast %20 : vector<1x512xf32> to vector<8x512xf32>
    %22 = arith.addf %19, %21 : vector<8x512xf32>
    %cst_17 = arith.constant 0.000000e+00 : f32
    %23 = vector.broadcast %cst_17 : f32 to vector<8x512xf32>
    %24 = arith.maximumf %22, %23 : vector<8x512xf32>
    %25 = arith.truncf %24 : vector<8x512xf32> to vector<8x512xbf16>
    %c0_18 = arith.constant 0 : index
    %c0_19 = arith.constant 0 : index
    %26 = vector.load %arg8[%c0_18, %c0_19] : memref<512x6xbf16, #tpu.memory_space<vmem>>, vector<512x6xbf16>
    %cst_20 = arith.constant dense<0.000000e+00> : vector<8x6xf32>
    %27 = tpu.matmul %25, %26, %cst_20 {dimension_numbers = #tpu.dot_dimension_numbers<[1], [0], [0], [1], [0, 0, 1, 1], [], []>} : vector<8x512xbf16>, vector<512x6xbf16>, vector<8x6xf32> -> vector<8x6xf32>
    %c0_21 = arith.constant 0 : index
    %c0_22 = arith.constant 0 : index
    %28 = vector.load %arg9[%c0_21, %c0_22] : memref<1x6xf32, #tpu.memory_space<vmem>>, vector<1x6xf32>
    %29 = vector.broadcast %28 : vector<1x6xf32> to vector<8x6xf32>
    %30 = arith.addf %27, %29 : vector<8x6xf32>
    %c0_23 = arith.constant 0 : index
    %c0_24 = arith.constant 0 : index
    %31 = vector.load %arg10[%c0_23, %c0_24] : memref<8x6xf32, #tpu.memory_space<vmem>>, vector<8x6xf32>
    tpu.vector_store %arg10[%c0_23, %c0_24], %30 {strides = array<i32>} : memref<8x6xf32, #tpu.memory_space<vmem>>, vector<8x6xf32>,
    return
  }
  func.func @transform_0(%arg0: i32) -> (i32, i32) {
    %c0_i32 = arith.constant 0 : i32
    %c0_i32_0 = arith.constant 0 : i32
    return %arg0, %c0_i32 : i32, i32
  }
  func.func @transform_1(%arg0: i32) -> (i32, i32) {
    %c0_i32 = arith.constant 0 : i32
    %c0_i32_0 = arith.constant 0 : i32
    %c0_i32_1 = arith.constant 0 : i32
    return %c0_i32, %c0_i32_0 : i32, i32
  }
  func.func @transform_2(%arg0: i32) -> (i32, i32) {
    %c0_i32 = arith.constant 0 : i32
    %c0_i32_0 = arith.constant 0 : i32
    %c0_i32_1 = arith.constant 0 : i32
    return %c0_i32, %c0_i32_0 : i32, i32
  }
  func.func @transform_3(%arg0: i32) -> (i32, i32) {
    %c0_i32 = arith.constant 0 : i32
    %c0_i32_0 = arith.constant 0 : i32
    %c0_i32_1 = arith.constant 0 : i32
    return %c0_i32, %c0_i32_0 : i32, i32
  }
  func.func @transform_4(%arg0: i32) -> (i32, i32) {
    %c0_i32 = arith.constant 0 : i32
    %c0_i32_0 = arith.constant 0 : i32
    %c0_i32_1 = arith.constant 0 : i32
    return %c0_i32, %c0_i32_0 : i32, i32
  }
  func.func @transform_5(%arg0: i32) -> (i32, i32) {
    %c0_i32 = arith.constant 0 : i32
    %c0_i32_0 = arith.constant 0 : i32
    %c0_i32_1 = arith.constant 0 : i32
    return %c0_i32, %c0_i32_0 : i32, i32
  }
  func.func @transform_6(%arg0: i32) -> (i32, i32) {
    %c0_i32 = arith.constant 0 : i32
    %c0_i32_0 = arith.constant 0 : i32
    %c0_i32_1 = arith.constant 0 : i32
    return %c0_i32, %c0_i32_0 : i32, i32
  }
  func.func @transform_7(%arg0: i32) -> (i32, i32) {
    %c0_i32 = arith.constant 0 : i32
    %c0_i32_0 = arith.constant 0 : i32
    %c0_i32_1 = arith.constant 0 : i32
    return %c0_i32, %c0_i32_0 : i32, i32
  }
  func.func @transform_8(%arg0: i32) -> (i32, i32) {
    %c0_i32 = arith.constant 0 : i32
    %c0_i32_0 = arith.constant 0 : i32
    %c0_i32_1 = arith.constant 0 : i32
    return %c0_i32, %c0_i32_0 : i32, i32
  }
  func.func @transform_9(%arg0: i32) -> (i32, i32) {
    %c0_i32 = arith.constant 0 : i32
    %c0_i32_0 = arith.constant 0 : i32
    return %arg0, %c0_i32 : i32, i32
  }
}

</mosaic_0001>

<llo_original>
// kernel: dqn_forward.1
$region0: #{dqn_forward.1}
  #allocation0 [shape = 'u32[]', space=smem, size = 0x4, offset = 0x4, fixed_abs, tag = 'smem constant byte address 0x4 - core index']
  #allocation1 [shape = 'u32[72,128]{1,0:T(1,128)}', space=vmem, size = 0x9000, scoped, tag = 'internal scratch']
  %s0 = inlined_call_operand.vmem [shape: f32[8,368], index: 0, kind: input, shape index: {}]
  %s1 = inlined_call_operand.hbm [shape: bf16[368,512], index: 1, kind: input, shape index: {}]
  %s2 = inlined_call_operand.vmem [shape: f32[1,512], index: 2, kind: input, shape index: {}]
  %s3 = inlined_call_operand.hbm [shape: bf16[512,512], index: 3, kind: input, shape index: {}]
  %s4 = inlined_call_operand.vmem [shape: f32[1,512], index: 4, kind: input, shape index: {}]
  %s5 = inlined_call_operand.hbm [shape: bf16[512,512], index: 5, kind: input, shape index: {}]
  %s6 = inlined_call_operand.vmem [shape: f32[1,512], index: 6, kind: input, shape index: {}]
  %s7 = inlined_call_operand.vmem [shape: bf16[512,6], index: 7, kind: input, shape index: {}]
  %s8 = inlined_call_operand.vmem [shape: f32[1,6], index: 8, kind: input, shape index: {}]
  %s9 = inlined_call_operand.hbm [shape: f32[8,6], index: 9, kind: output, shape index: {}]
  %s10 = sld [smem:[#allocation0]]
  $region58: #{dqn_forward.1} parent=0
    _
  %s12 = ssub.s32 1, %s10
  %s13 = scalar_select 0, %s12, %s10
  $region1: #{dqn_forward.1} parent=0
    #allocation2 [shape = 'u8[376832]{0}', space=vmem, size = 0x5c000, scoped, tag = 'input window, operand 1, single buffered']
    #allocation3 [shape = 's32[1]{0}', space=sflag, size = 0x4, scoped, tag = 'scoped memory for dqn_forward.1']
    #allocation4 [shape = 's32[1]{0}', space=sflag, size = 0x4, scoped, tag = 'scoped memory for dqn_forward.1']
    #allocation5 [shape = 'u8[524288]{0}', space=vmem, size = 0x80000, scoped, tag = 'input window, operand 3, single buffered']
    #allocation6 [shape = 's32[1]{0}', space=sflag, size = 0x4, scoped, tag = 'scoped memory for dqn_forward.1']
    #allocation7 [shape = 'u8[524288]{0}', space=vmem, size = 0x80000, scoped, tag = 'input window, operand 5, single buffered']
    #allocation8 [shape = 'u8[4096]{0}', space=vmem, size = 0x1000, scoped, tag = 'output window, operand 0, single buffered']
    %14 = vsyncpa [#allocation3], 0
    %15 = vsyncpa [#allocation6], 0
    %16 = vsyncpa [#allocation4], 0
    // Predicated region
    $region2: #{dqn_forward.1} parent=1 // pred_check
      _
    $region3: #{dqn_forward.1} parent=1 // pred_check_branch
      %18 = sbr.rel (0) target = $region5
    $region4: #{dqn_forward.1} parent=1 // pred_region
      _
    $region5: #{dqn_forward.1} parent=1 // pred_fallthru
      _
    // Predicated region
    $region6: #{dqn_forward.1} parent=1 // pred_check
      _
    $region7: #{dqn_forward.1} parent=1 // pred_check_branch
      %20 = sbr.rel (0) target = $region9
    $region8: #{dqn_forward.1} parent=1 // pred_region
      %22 = vsyncadd [#allocation3], 0
      %s23 = sshll.u32 %s1, 4
      %s24 = int_to_ptr.hbm [resolvable:$true] %s23
      %s25 = sshll.u32 [#allocation2], 4
      %s26 = int_to_ptr.vmem [resolvable:$true] %s25
      %31 = dma.hbm_to_vmem [thread:$0]  %s24, 11776, %s26, [#allocation3], 256, 256, 16
    $region9: #{dqn_forward.1} parent=1 // pred_fallthru
      _
    // Predicated region
    $region10: #{dqn_forward.1} parent=1 // pred_check
      _
    $region11: #{dqn_forward.1} parent=1 // pred_check_branch
      %33 = sbr.rel (0) target = $region13
    $region12: #{dqn_forward.1} parent=1 // pred_region
      _
    $region13: #{dqn_forward.1} parent=1 // pred_fallthru
      _
    // Predicated region
    $region14: #{dqn_forward.1} parent=1 // pred_check
      _
    $region15: #{dqn_forward.1} parent=1 // pred_check_branch
      %35 = sbr.rel (0) target = $region17
    $region16: #{dqn_forward.1} parent=1 // pred_region
      %37 = vsyncadd [#allocation6], 0
      %s38 = sshll.u32 %s3, 4
      %s39 = int_to_ptr.hbm [resolvable:$true] %s38
      %s40 = sshll.u32 [#allocation5], 4
      %s41 = int_to_ptr.vmem [resolvable:$true] %s40
      %46 = dma.hbm_to_vmem [thread:$0]  %s39, 16384, %s41, [#allocation6], 256, 256, 16
    $region17: #{dqn_forward.1} parent=1 // pred_fallthru
      _
    // Predicated region
    $region18: #{dqn_forward.1} parent=1 // pred_check
      _
    $region19: #{dqn_forward.1} parent=1 // pred_check_branch
      %48 = sbr.rel (0) target = $region21
    $region20: #{dqn_forward.1} parent=1 // pred_region
      _
    $region21: #{dqn_forward.1} parent=1 // pred_fallthru
      _
    // Predicated region
    $region22: #{dqn_forward.1} parent=1 // pred_check
      _
    $region23: #{dqn_forward.1} parent=1 // pred_check_branch
      %50 = sbr.rel (0) target = $region25
    $region24: #{dqn_forward.1} parent=1 // pred_region
      %52 = vsyncadd [#allocation6], 0
      %s53 = sshll.u32 %s5, 4
      %s54 = int_to_ptr.hbm [resolvable:$true] %s53
      %s55 = sshll.u32 [#allocation7], 4
      %s56 = int_to_ptr.vmem [resolvable:$true] %s55
      %61 = dma.hbm_to_vmem [thread:$0]  %s54, 16384, %s56, [#allocation6], 256, 256, 16
    $region25: #{dqn_forward.1} parent=1 // pred_fallthru
      _
    // Predicated region
    $region26: #{dqn_forward.1} parent=1 // pred_check
      _
    $region27: #{dqn_forward.1} parent=1 // pred_check_branch
      %63 = sbr.rel (0) target = $region29
    $region28: #{dqn_forward.1} parent=1 // pred_region
      _
    $region29: #{dqn_forward.1} parent=1 // pred_fallthru
      _
    // Predicated region
    $region30: #{dqn_forward.1} parent=1 // pred_check
      _
    $region31: #{dqn_forward.1} parent=1 // pred_check_branch
      %65 = sbr.rel (0) target = $region33
    $region32: #{dqn_forward.1} parent=1 // pred_region
      _
    $region33: #{dqn_forward.1} parent=1 // pred_fallthru
      _
    // Predicated region
    $region34: #{dqn_forward.1} parent=1 // pred_check
      _
    $region35: #{dqn_forward.1} parent=1 // pred_check_branch
      %67 = sbr.rel (0) target = $region37
    $region36: #{dqn_forward.1} parent=1 // pred_region
      _
    $region37: #{dqn_forward.1} parent=1 // pred_fallthru
      _
    // Predicated region
    $region38: #{dqn_forward.1} parent=1 // pred_check
      _
    $region39: #{dqn_forward.1} parent=1 // pred_check_branch
      %69 = sbr.rel (0) target = $region41
    $region40: #{dqn_forward.1} parent=1 // pred_region
      %71 = dma.done [#allocation3], 11776
    $region41: #{dqn_forward.1} parent=1 // pred_fallthru
      _
    // Predicated region
    $region42: #{dqn_forward.1} parent=1 // pred_check
      _
    $region43: #{dqn_forward.1} parent=1 // pred_check_branch
      %73 = sbr.rel (0) target = $region45
    $region44: #{dqn_forward.1} parent=1 // pred_region
      %75 = dma.done [#allocation6], 16384
    $region45: #{dqn_forward.1} parent=1 // pred_fallthru
      _
    // Predicated region
    $region46: #{dqn_forward.1} parent=1 // pred_check
      _
    $region47: #{dqn_forward.1} parent=1 // pred_check_branch
      %77 = sbr.rel (0) target = $region49
    $region48: #{dqn_forward.1} parent=1 // pred_region
      %79 = dma.done [#allocation6], 16384
    $region49: #{dqn_forward.1} parent=1 // pred_fallthru
      _
    %v81 = vld [vmem:[%s0] sm:$0xff]
    %v82 = vld [vmem:[%s0 + $0x8] sm:$0xff]
    %v83 = vld [vmem:[%s0 + $0x10] sm:$0xff]
    %v84 = vpack.c.bf16 %v81, %v81
    %v85 = vpack.c.bf16 %v82, %v82
    %v86 = vpack.c.bf16 %v83, %v83
    %v87 = vld [vmem:[#allocation2] sm:$0xff]
    %v88 = vld [vmem:[#allocation2 + $0x8] sm:$0xff]
    %v89 = vld [vmem:[#allocation2 + $0x10] sm:$0xff]
    %v90 = vld [vmem:[#allocation2 + $0x18] sm:$0xff]
    %v91 = vld [vmem:[#allocation2 + $0x20] sm:$0xff]
    %v92 = vld [vmem:[#allocation2 + $0x28] sm:$0xff]
    %v93 = vld [vmem:[#allocation2 + $0x30] sm:$0xff]
    %v94 = vld [vmem:[#allocation2 + $0x38] sm:$0xff]
    %v95 = vld [vmem:[#allocation2 + $0x40] sm:$0xff]
    %v96 = vld [vmem:[#allocation2 + $0x48] sm:$0xff]
    %v97 = vld [vmem:[#allocation2 + $0x50] sm:$0xff]
    %v98 = vld [vmem:[#allocation2 + $0x58] sm:$0xff]
    %v99 = vld [vmem:[#allocation2 + $0x60] sm:$0xff]
    %v100 = vld [vmem:[#allocation2 + $0x68] sm:$0xff]
    %v101 = vld [vmem:[#allocation2 + $0x70] sm:$0xff]
    %v102 = vld [vmem:[#allocation2 + $0x78] sm:$0xff]
    %v103 = vld [vmem:[#allocation2 + $0x80] sm:$0xff]
    %v104 = vld [vmem:[#allocation2 + $0x88] sm:$0xff]
    %v105 = vld [vmem:[#allocation2 + $0x90] sm:$0xff]
    %v106 = vld [vmem:[#allocation2 + $0x98] sm:$0xff]
    %v107 = vld [vmem:[#allocation2 + $0xa0] sm:$0xff]
    %v108 = vld [vmem:[#allocation2 + $0xa8] sm:$0xff]
    %v109 = vld [vmem:[#allocation2 + $0xb0] sm:$0xff]
    %v110 = vld [vmem:[#allocation2 + $0xb8] sm:$0xff]
    %v111 = vld [vmem:[#allocation2 + $0xc0] sm:$0xff]
    %v112 = vld [vmem:[#allocation2 + $0xc8] sm:$0xff]
    %v113 = vld [vmem:[#allocation2 + $0xd0] sm:$0xff]
    %v114 = vld [vmem:[#allocation2 + $0xd8] sm:$0xff]
    %v115 = vld [vmem:[#allocation2 + $0xe0] sm:$0xff]
    %v116 = vld [vmem:[#allocation2 + $0xe8] sm:$0xff]
    %v117 = vld [vmem:[#allocation2 + $0xf0] sm:$0xff]
    %v118 = vld [vmem:[#allocation2 + $0xf8] sm:$0xff]
    %v119 = vld [vmem:[#allocation2 + $0x100] sm:$0xff]
    %v120 = vld [vmem:[#allocation2 + $0x108] sm:$0xff]
    %v121 = vld [vmem:[#allocation2 + $0x110] sm:$0xff]
    %v122 = vld [vmem:[#allocation2 + $0x118] sm:$0xff]
    %v123 = vld [vmem:[#allocation2 + $0x120] sm:$0xff]
    %v124 = vld [vmem:[#allocation2 + $0x128] sm:$0xff]
    %v125 = vld [vmem:[#allocation2 + $0x130] sm:$0xff]
    %v126 = vld [vmem:[#allocation2 + $0x138] sm:$0xff]
    %v127 = vld [vmem:[#allocation2 + $0x140] sm:$0xff]
    %v128 = vld [vmem:[#allocation2 + $0x148] sm:$0xff]
    %v129 = vld [vmem:[#allocation2 + $0x150] sm:$0xff]
    %v130 = vld [vmem:[#allocation2 + $0x158] sm:$0xff]
    %v131 = vld [vmem:[#allocation2 + $0x160] sm:$0xff]
    %v132 = vld [vmem:[#allocation2 + $0x168] sm:$0xff]
    %v133 = vld [vmem:[#allocation2 + $0x170] sm:$0xff]
    %v134 = vld [vmem:[#allocation2 + $0x178] sm:$0xff]
    %v135 = vld [vmem:[#allocation2 + $0x180] sm:$0xff]
    %v136 = vld [vmem:[#allocation2 + $0x188] sm:$0xff]
    %v137 = vld [vmem:[#allocation2 + $0x190] sm:$0xff]
    %v138 = vld [vmem:[#allocation2 + $0x198] sm:$0xff]
    %v139 = vld [vmem:[#allocation2 + $0x1a0] sm:$0xff]
    %v140 = vld [vmem:[#allocation2 + $0x1a8] sm:$0xff]
    %v141 = vld [vmem:[#allocation2 + $0x1b0] sm:$0xff]
    %v142 = vld [vmem:[#allocation2 + $0x1b8] sm:$0xff]
    %v143 = vld [vmem:[#allocation2 + $0x1c0] sm:$0xff]
    %v144 = vld [vmem:[#allocation2 + $0x1c8] sm:$0xff]
    %v145 = vld [vmem:[#allocation2 + $0x1d0] sm:$0xff]
    %v146 = vld [vmem:[#allocation2 + $0x1d8] sm:$0xff]
    %v147 = vld [vmem:[#allocation2 + $0x1e0] sm:$0xff]
    %v148 = vld [vmem:[#allocation2 + $0x1e8] sm:$0xff]
    %v149 = vld [vmem:[#allocation2 + $0x1f0] sm:$0xff]
    %v150 = vld [vmem:[#allocation2 + $0x1f8] sm:$0xff]
    %v151 = vld [vmem:[#allocation2 + $0x200] sm:$0xff]
    %v152 = vld [vmem:[#allocation2 + $0x208] sm:$0xff]
    %v153 = vld [vmem:[#allocation2 + $0x210] sm:$0xff]
    %v154 = vld [vmem:[#allocation2 + $0x218] sm:$0xff]
    %v155 = vld [vmem:[#allocation2 + $0x220] sm:$0xff]
    %v156 = vld [vmem:[#allocation2 + $0x228] sm:$0xff]
    %v157 = vld [vmem:[#allocation2 + $0x230] sm:$0xff]
    %v158 = vld [vmem:[#allocation2 + $0x238] sm:$0xff]
    %v159 = vld [vmem:[#allocation2 + $0x240] sm:$0xff]
    %v160 = vld [vmem:[#allocation2 + $0x248] sm:$0xff]
    %v161 = vld [vmem:[#allocation2 + $0x250] sm:$0xff]
    %v162 = vld [vmem:[#allocation2 + $0x258] sm:$0xff]
    %v163 = vld [vmem:[#allocation2 + $0x260] sm:$0xff]
    %v164 = vld [vmem:[#allocation2 + $0x268] sm:$0xff]
    %v165 = vld [vmem:[#allocation2 + $0x270] sm:$0xff]
    %v166 = vld [vmem:[#allocation2 + $0x278] sm:$0xff]
    %v167 = vld [vmem:[#allocation2 + $0x280] sm:$0xff]
    %v168 = vld [vmem:[#allocation2 + $0x288] sm:$0xff]
    %v169 = vld [vmem:[#allocation2 + $0x290] sm:$0xff]
    %v170 = vld [vmem:[#allocation2 + $0x298] sm:$0xff]
    %v171 = vld [vmem:[#allocation2 + $0x2a0] sm:$0xff]
    %v172 = vld [vmem:[#allocation2 + $0x2a8] sm:$0xff]
    %v173 = vld [vmem:[#allocation2 + $0x2b0] sm:$0xff]
    %v174 = vld [vmem:[#allocation2 + $0x2b8] sm:$0xff]
    %v175 = vld [vmem:[#allocation2 + $0x2c0] sm:$0xff]
    %v176 = vld [vmem:[#allocation2 + $0x2c8] sm:$0xff]
    %v177 = vld [vmem:[#allocation2 + $0x2d0] sm:$0xff]
    %v178 = vld [vmem:[#allocation2 + $0x2d8] sm:$0xff]
    %v179 = vld [vmem:[%s2] sm:$0xf]
    %v181 = vperm.slane %v179, 0
    %v182 = vperm.slane %v179, 1
    %v183 = vperm.slane %v179, 2
    %v184 = vperm.slane %v179, 3
    %v281 = vunpack.c.l.b16 %v87
    %v282 = vunpack.c.h.b16 %v87
    %v283 = vunpack.c.l.b16 %v88
    %v284 = vunpack.c.h.b16 %v88
    %v285 = vunpack.c.l.b16 %v89
    %v286 = vunpack.c.h.b16 %v89
    %v287 = vunpack.c.l.b16 %v90
    %v288 = vunpack.c.h.b16 %v90
    %v289 = vunpack.c.l.b16 %v91
    %v290 = vunpack.c.h.b16 %v91
    %v291 = vunpack.c.l.b16 %v92
    %v292 = vunpack.c.h.b16 %v92
    %v293 = vunpack.c.l.b16 %v93
    %v294 = vunpack.c.h.b16 %v93
    %v295 = vunpack.c.l.b16 %v94
    %v296 = vunpack.c.h.b16 %v94
    %v297 = vunpack.c.l.b16 %v95
    %v298 = vunpack.c.h.b16 %v95
    %v299 = vunpack.c.l.b16 %v96
    %v300 = vunpack.c.h.b16 %v96
    %v301 = vunpack.c.l.b16 %v97
    %v302 = vunpack.c.h.b16 %v97
    %v303 = vunpack.c.l.b16 %v98
    %v304 = vunpack.c.h.b16 %v98
    %v305 = vunpack.c.l.b16 %v99
    %v306 = vunpack.c.h.b16 %v99
    %v307 = vunpack.c.l.b16 %v100
    %v308 = vunpack.c.h.b16 %v100
    %v309 = vunpack.c.l.b16 %v101
    %v310 = vunpack.c.h.b16 %v101
    %v311 = vunpack.c.l.b16 %v102
    %v312 = vunpack.c.h.b16 %v102
    %v313 = vunpack.c.l.b16 %v103
    %v314 = vunpack.c.h.b16 %v103
    %v315 = vunpack.c.l.b16 %v104
    %v316 = vunpack.c.h.b16 %v104
    %v317 = vunpack.c.l.b16 %v105
    %v318 = vunpack.c.h.b16 %v105
    %v319 = vunpack.c.l.b16 %v106
    %v320 = vunpack.c.h.b16 %v106
    %v321 = vunpack.c.l.b16 %v107
    %v322 = vunpack.c.h.b16 %v107
    %v323 = vunpack.c.l.b16 %v108
    %v324 = vunpack.c.h.b16 %v108
    %v325 = vunpack.c.l.b16 %v109
    %v326 = vunpack.c.h.b16 %v109
    %v327 = vunpack.c.l.b16 %v110
    %v328 = vunpack.c.h.b16 %v110
    %v329 = vunpack.c.l.b16 %v111
    %v330 = vunpack.c.h.b16 %v111
    %v331 = vunpack.c.l.b16 %v112
    %v332 = vunpack.c.h.b16 %v112
    %v333 = vunpack.c.l.b16 %v113
    %v334 = vunpack.c.h.b16 %v113
    %v335 = vunpack.c.l.b16 %v114
    %v336 = vunpack.c.h.b16 %v114
    %v337 = vunpack.c.l.b16 %v115
    %v338 = vunpack.c.h.b16 %v115
    %v339 = vunpack.c.l.b16 %v116
    %v340 = vunpack.c.h.b16 %v116
    %v341 = vunpack.c.l.b16 %v117
    %v342 = vunpack.c.h.b16 %v117
    %v343 = vunpack.c.l.b16 %v118
    %v344 = vunpack.c.h.b16 %v118
    %v345 = vunpack.c.l.b16 %v119
    %v346 = vunpack.c.h.b16 %v119
    %v347 = vunpack.c.l.b16 %v120
    %v348 = vunpack.c.h.b16 %v120
    %v349 = vunpack.c.l.b16 %v121
    %v350 = vunpack.c.h.b16 %v121
    %v351 = vunpack.c.l.b16 %v122
    %v352 = vunpack.c.h.b16 %v122
    %v353 = vunpack.c.l.b16 %v123
    %v354 = vunpack.c.h.b16 %v123
    %v355 = vunpack.c.l.b16 %v124
    %v356 = vunpack.c.h.b16 %v124
    %v357 = vunpack.c.l.b16 %v125
    %v358 = vunpack.c.h.b16 %v125
    %v359 = vunpack.c.l.b16 %v126
    %v360 = vunpack.c.h.b16 %v126
    %v361 = vunpack.c.l.b16 %v127
    %v362 = vunpack.c.h.b16 %v127
    %v363 = vunpack.c.l.b16 %v128
    %v364 = vunpack.c.h.b16 %v128
    %v365 = vunpack.c.l.b16 %v129
    %v366 = vunpack.c.h.b16 %v129
    %v367 = vunpack.c.l.b16 %v130
    %v368 = vunpack.c.h.b16 %v130
    %v369 = vunpack.c.l.b16 %v131
    %v370 = vunpack.c.h.b16 %v131
    %v371 = vunpack.c.l.b16 %v132
    %v372 = vunpack.c.h.b16 %v132
    %v373 = vunpack.c.l.b16 %v133
    %v374 = vunpack.c.h.b16 %v133
    %v375 = vunpack.c.l.b16 %v134
    %v376 = vunpack.c.h.b16 %v134
    %v377 = vunpack.c.l.b16 %v135
    %v378 = vunpack.c.h.b16 %v135
    %v379 = vunpack.c.l.b16 %v136
    %v380 = vunpack.c.h.b16 %v136
    %v381 = vunpack.c.l.b16 %v137
    %v382 = vunpack.c.h.b16 %v137
    %v383 = vunpack.c.l.b16 %v138
    %v384 = vunpack.c.h.b16 %v138
    %v385 = vunpack.c.l.b16 %v139
    %v386 = vunpack.c.h.b16 %v139
    %v387 = vunpack.c.l.b16 %v140
    %v388 = vunpack.c.h.b16 %v140
    %v389 = vunpack.c.l.b16 %v141
    %v390 = vunpack.c.h.b16 %v141
    %v391 = vunpack.c.l.b16 %v142
    %v392 = vunpack.c.h.b16 %v142
    %v393 = vunpack.c.l.b16 %v143
    %v394 = vunpack.c.h.b16 %v143
    %v395 = vunpack.c.l.b16 %v144
    %v396 = vunpack.c.h.b16 %v144
    %v397 = vunpack.c.l.b16 %v145
    %v398 = vunpack.c.h.b16 %v145
    %v399 = vunpack.c.l.b16 %v146
    %v400 = vunpack.c.h.b16 %v146
    %v401 = vunpack.c.l.b16 %v147
    %v402 = vunpack.c.h.b16 %v147
    %v403 = vunpack.c.l.b16 %v148
    %v404 = vunpack.c.h.b16 %v148
    %v405 = vunpack.c.l.b16 %v149
    %v406 = vunpack.c.h.b16 %v149
    %v407 = vunpack.c.l.b16 %v150
    %v408 = vunpack.c.h.b16 %v150
    %v409 = vunpack.c.l.b16 %v151
    %v410 = vunpack.c.h.b16 %v151
    %v411 = vunpack.c.l.b16 %v152
    %v412 = vunpack.c.h.b16 %v152
    %v413 = vunpack.c.l.b16 %v153
    %v414 = vunpack.c.h.b16 %v153
    %v415 = vunpack.c.l.b16 %v154
    %v416 = vunpack.c.h.b16 %v154
    %v417 = vunpack.c.l.b16 %v155
    %v418 = vunpack.c.h.b16 %v155
    %v419 = vunpack.c.l.b16 %v156
    %v420 = vunpack.c.h.b16 %v156
    %v421 = vunpack.c.l.b16 %v157
    %v422 = vunpack.c.h.b16 %v157
    %v423 = vunpack.c.l.b16 %v158
    %v424 = vunpack.c.h.b16 %v158
    %v425 = vunpack.c.l.b16 %v159
    %v426 = vunpack.c.h.b16 %v159
    %v427 = vunpack.c.l.b16 %v160
    %v428 = vunpack.c.h.b16 %v160
    %v429 = vunpack.c.l.b16 %v161
    %v430 = vunpack.c.h.b16 %v161
    %v431 = vunpack.c.l.b16 %v162
    %v432 = vunpack.c.h.b16 %v162
    %v433 = vunpack.c.l.b16 %v163
    %v434 = vunpack.c.h.b16 %v163
    %v435 = vunpack.c.l.b16 %v164
    %v436 = vunpack.c.h.b16 %v164
    %v437 = vunpack.c.l.b16 %v165
    %v438 = vunpack.c.h.b16 %v165
    %v439 = vunpack.c.l.b16 %v166
    %v440 = vunpack.c.h.b16 %v166
    %v441 = vunpack.c.l.b16 %v167
    %v442 = vunpack.c.h.b16 %v167
    %v443 = vunpack.c.l.b16 %v168
    %v444 = vunpack.c.h.b16 %v168
    %v445 = vunpack.c.l.b16 %v169
    %v446 = vunpack.c.h.b16 %v169
    %v447 = vunpack.c.l.b16 %v170
    %v448 = vunpack.c.h.b16 %v170
    %v449 = vunpack.c.l.b16 %v171
    %v450 = vunpack.c.h.b16 %v171
    %v451 = vunpack.c.l.b16 %v172
    %v452 = vunpack.c.h.b16 %v172
    %v453 = vunpack.c.l.b16 %v173
    %v454 = vunpack.c.h.b16 %v173
    %v455 = vunpack.c.l.b16 %v174
    %v456 = vunpack.c.h.b16 %v174
    %v457 = vunpack.c.l.b16 %v175
    %v458 = vunpack.c.h.b16 %v175
    %v459 = vunpack.c.l.b16 %v176
    %v460 = vunpack.c.h.b16 %v176
    %v461 = vunpack.c.l.b16 %v177
    %v462 = vunpack.c.h.b16 %v177
    %v463 = vunpack.c.l.b16 %v178
    %v464 = vunpack.c.h.b16 %v178
    %v465 = vpack.c.b16 %v285, %v281
    %v466 = vpack.c.b16 %v286, %v282
    %v467 = vpack.c.b16 %v287, %v283
    %v468 = vpack.c.b16 %v288, %v284
    %v469 = vpack.c.b16 %v293, %v289
    %v470 = vpack.c.b16 %v294, %v290
    %v471 = vpack.c.b16 %v295, %v291
    %v472 = vpack.c.b16 %v296, %v292
    %v473 = vpack.c.b16 %v301, %v297
    %v474 = vpack.c.b16 %v302, %v298
    %v475 = vpack.c.b16 %v303, %v299
    %v476 = vpack.c.b16 %v304, %v300
    %v477 = vpack.c.b16 %v309, %v305
    %v478 = vpack.c.b16 %v310, %v306
    %v479 = vpack.c.b16 %v311, %v307
    %v480 = vpack.c.b16 %v312, %v308
    %v481 = vpack.c.b16 %v317, %v313
    %v482 = vpack.c.b16 %v318, %v314
    %v483 = vpack.c.b16 %v319, %v315
    %v484 = vpack.c.b16 %v320, %v316
    %v485 = vpack.c.b16 %v325, %v321
    %v486 = vpack.c.b16 %v326, %v322
    %v487 = vpack.c.b16 %v327, %v323
    %v488 = vpack.c.b16 %v328, %v324
    %v489 = vpack.c.b16 %v333, %v329
    %v490 = vpack.c.b16 %v334, %v330
    %v491 = vpack.c.b16 %v335, %v331
    %v492 = vpack.c.b16 %v336, %v332
    %v493 = vpack.c.b16 %v341, %v337
    %v494 = vpack.c.b16 %v342, %v338
    %v495 = vpack.c.b16 %v343, %v339
    %v496 = vpack.c.b16 %v344, %v340
    %v497 = vpack.c.b16 %v349, %v345
    %v498 = vpack.c.b16 %v350, %v346
    %v499 = vpack.c.b16 %v351, %v347
    %v500 = vpack.c.b16 %v352, %v348
    %v501 = vpack.c.b16 %v357, %v353
    %v502 = vpack.c.b16 %v358, %v354
    %v503 = vpack.c.b16 %v359, %v355
    %v504 = vpack.c.b16 %v360, %v356
    %v505 = vpack.c.b16 %v365, %v361
    %v506 = vpack.c.b16 %v366, %v362
    %v507 = vpack.c.b16 %v367, %v363
    %v508 = vpack.c.b16 %v368, %v364
    %v509 = vpack.c.b16 %v373, %v369
    %v510 = vpack.c.b16 %v374, %v370
    %v511 = vpack.c.b16 %v375, %v371
    %v512 = vpack.c.b16 %v376, %v372
    %v513 = vpack.c.b16 %v381, %v377
    %v514 = vpack.c.b16 %v382, %v378
    %v515 = vpack.c.b16 %v383, %v379
    %v516 = vpack.c.b16 %v384, %v380
    %v517 = vpack.c.b16 %v389, %v385
    %v518 = vpack.c.b16 %v390, %v386
    %v519 = vpack.c.b16 %v391, %v387
    %v520 = vpack.c.b16 %v392, %v388
    %v521 = vpack.c.b16 %v397, %v393
    %v522 = vpack.c.b16 %v398, %v394
    %v523 = vpack.c.b16 %v399, %v395
    %v524 = vpack.c.b16 %v400, %v396
    %v525 = vpack.c.b16 %v405, %v401
    %v526 = vpack.c.b16 %v406, %v402
    %v527 = vpack.c.b16 %v407, %v403
    %v528 = vpack.c.b16 %v408, %v404
    %v529 = vpack.c.b16 %v413, %v409
    %v530 = vpack.c.b16 %v414, %v410
    %v531 = vpack.c.b16 %v415, %v411
    %v532 = vpack.c.b16 %v416, %v412
    %v533 = vpack.c.b16 %v421, %v417
    %v534 = vpack.c.b16 %v422, %v418
    %v535 = vpack.c.b16 %v423, %v419
    %v536 = vpack.c.b16 %v424, %v420
    %v537 = vpack.c.b16 %v429, %v425
    %v538 = vpack.c.b16 %v430, %v426
    %v539 = vpack.c.b16 %v431, %v427
    %v540 = vpack.c.b16 %v432, %v428
    %v541 = vpack.c.b16 %v437, %v433
    %v542 = vpack.c.b16 %v438, %v434
    %v543 = vpack.c.b16 %v439, %v435
    %v544 = vpack.c.b16 %v440, %v436
    %v545 = vpack.c.b16 %v445, %v441
    %v546 = vpack.c.b16 %v446, %v442
    %v547 = vpack.c.b16 %v447, %v443
    %v548 = vpack.c.b16 %v448, %v444
    %v549 = vpack.c.b16 %v453, %v449
    %v550 = vpack.c.b16 %v454, %v450
    %v551 = vpack.c.b16 %v455, %v451
    %v552 = vpack.c.b16 %v456, %v452
    %v553 = vpack.c.b16 %v461, %v457
    %v554 = vpack.c.b16 %v462, %v458
    %v555 = vpack.c.b16 %v463, %v459
    %v556 = vpack.c.b16 %v464, %v460
    %vm649 = vcmask 916480
    %v651 = vsel %vm649, %v86, 0
    %653 = vmatpush.bf16.msra.mxu0 %v493
    %654 = vmatpush.bf16.msra.mxu0 %v489
    %655 = vmatpush.bf16.msra.mxu0 %v485
    %656 = vmatpush.bf16.msra.mxu0 %v481
    %657 = vmatpush.bf16.msra.mxu0 %v477
    %658 = vmatpush.bf16.msra.mxu0 %v473
    %659 = vmatpush.bf16.msra.mxu0 %v469
    %660 = vmatpush.bf16.msra.mxu0 %v465
    %661 = vmatmul.bf16.gmra.mxu0 %v84
    %v662 = vpop.f32.mrf.mxu0
    %v663 = vadd.f32 %v181, %v662
    %v664 = vpop.f32.mrf.mxu0
    %665 = vdwg.mxu0
    %666 = vmatpush.bf16.msra.mxu0 %v525
    %667 = vmatpush.bf16.msra.mxu0 %v521
    %668 = vmatpush.bf16.msra.mxu0 %v517
    %669 = vmatpush.bf16.msra.mxu0 %v513
    %670 = vmatpush.bf16.msra.mxu0 %v509
    %671 = vmatpush.bf16.msra.mxu0 %v505
    %672 = vmatpush.bf16.msra.mxu0 %v501
    %673 = vmatpush.bf16.msra.mxu0 %v497
    %674 = vmatmul.bf16.gmra.mxu0 %v85
    %v675 = vpop.f32.mrf.mxu0
    %v676 = vadd.f32 %v663, %v675
    %v677 = vpop.f32.mrf.mxu0
    %678 = vdwg.mxu0
    %679 = vmatpush.bf16.msra.mxu0 0
    %680 = vmatpush.bf16.msra.mxu0 %v553
    %681 = vmatpush.bf16.msra.mxu0 %v549
    %682 = vmatpush.bf16.msra.mxu0 %v545
    %683 = vmatpush.bf16.msra.mxu0 %v541
    %684 = vmatpush.bf16.msra.mxu0 %v537
    %685 = vmatpush.bf16.msra.mxu0 %v533
    %686 = vmatpush.bf16.msra.mxu0 %v529
    %687 = vmatmul.bf16.gmra.mxu0 %v651
    %v688 = vpop.f32.mrf.mxu0
    %v689 = vadd.f32 %v676, %v688
    %v690 = vpop.f32.mrf.mxu0
    %691 = vdwg.mxu0
    %692 = vmatpush.bf16.msra.mxu0 %v494
    %693 = vmatpush.bf16.msra.mxu0 %v490
    %694 = vmatpush.bf16.msra.mxu0 %v486
    %695 = vmatpush.bf16.msra.mxu0 %v482
    %696 = vmatpush.bf16.msra.mxu0 %v478
    %697 = vmatpush.bf16.msra.mxu0 %v474
    %698 = vmatpush.bf16.msra.mxu0 %v470
    %699 = vmatpush.bf16.msra.mxu0 %v466
    %700 = vmatmul.bf16.gmra.mxu0 %v84
    %v701 = vpop.f32.mrf.mxu0
    %v702 = vadd.f32 %v182, %v701
    %v703 = vpop.f32.mrf.mxu0
    %704 = vdwg.mxu0
    %705 = vmatpush.bf16.msra.mxu0 %v526
    %706 = vmatpush.bf16.msra.mxu0 %v522
    %707 = vmatpush.bf16.msra.mxu0 %v518
    %708 = vmatpush.bf16.msra.mxu0 %v514
    %709 = vmatpush.bf16.msra.mxu0 %v510
    %710 = vmatpush.bf16.msra.mxu0 %v506
    %711 = vmatpush.bf16.msra.mxu0 %v502
    %712 = vmatpush.bf16.msra.mxu0 %v498
    %713 = vmatmul.bf16.gmra.mxu0 %v85
    %v714 = vpop.f32.mrf.mxu0
    %v715 = vadd.f32 %v702, %v714
    %v716 = vpop.f32.mrf.mxu0
    %717 = vdwg.mxu0
    %718 = vmatpush.bf16.msra.mxu0 0
    %719 = vmatpush.bf16.msra.mxu0 %v554
    %720 = vmatpush.bf16.msra.mxu0 %v550
    %721 = vmatpush.bf16.msra.mxu0 %v546
    %722 = vmatpush.bf16.msra.mxu0 %v542
    %723 = vmatpush.bf16.msra.mxu0 %v538
    %724 = vmatpush.bf16.msra.mxu0 %v534
    %725 = vmatpush.bf16.msra.mxu0 %v530
    %726 = vmatmul.bf16.gmra.mxu0 %v651
    %v727 = vpop.f32.mrf.mxu0
    %v728 = vadd.f32 %v715, %v727
    %v729 = vpop.f32.mrf.mxu0
    %730 = vdwg.mxu0
    %731 = vmatpush.bf16.msra.mxu0 %v495
    %732 = vmatpush.bf16.msra.mxu0 %v491
    %733 = vmatpush.bf16.msra.mxu0 %v487
    %734 = vmatpush.bf16.msra.mxu0 %v483
    %735 = vmatpush.bf16.msra.mxu0 %v479
    %736 = vmatpush.bf16.msra.mxu0 %v475
    %737 = vmatpush.bf16.msra.mxu0 %v471
    %738 = vmatpush.bf16.msra.mxu0 %v467
    %739 = vmatmul.bf16.gmra.mxu0 %v84
    %v740 = vpop.f32.mrf.mxu0
    %v741 = vadd.f32 %v183, %v740
    %v742 = vpop.f32.mrf.mxu0
    %743 = vdwg.mxu0
    %744 = vmatpush.bf16.msra.mxu0 %v527
    %745 = vmatpush.bf16.msra.mxu0 %v523
    %746 = vmatpush.bf16.msra.mxu0 %v519
    %747 = vmatpush.bf16.msra.mxu0 %v515
    %748 = vmatpush.bf16.msra.mxu0 %v511
    %749 = vmatpush.bf16.msra.mxu0 %v507
    %750 = vmatpush.bf16.msra.mxu0 %v503
    %751 = vmatpush.bf16.msra.mxu0 %v499
    %752 = vmatmul.bf16.gmra.mxu0 %v85
    %v753 = vpop.f32.mrf.mxu0
    %v754 = vadd.f32 %v741, %v753
    %v755 = vpop.f32.mrf.mxu0
    %756 = vdwg.mxu0
    %757 = vmatpush.bf16.msra.mxu0 0
    %758 = vmatpush.bf16.msra.mxu0 %v555
    %759 = vmatpush.bf16.msra.mxu0 %v551
    %760 = vmatpush.bf16.msra.mxu0 %v547
    %761 = vmatpush.bf16.msra.mxu0 %v543
    %762 = vmatpush.bf16.msra.mxu0 %v539
    %763 = vmatpush.bf16.msra.mxu0 %v535
    %764 = vmatpush.bf16.msra.mxu0 %v531
    %765 = vmatmul.bf16.gmra.mxu0 %v651
    %v766 = vpop.f32.mrf.mxu0
    %v767 = vadd.f32 %v754, %v766
    %v768 = vpop.f32.mrf.mxu0
    %769 = vdwg.mxu0
    %770 = vmatpush.bf16.msra.mxu0 %v496
    %771 = vmatpush.bf16.msra.mxu0 %v492
    %772 = vmatpush.bf16.msra.mxu0 %v488
    %773 = vmatpush.bf16.msra.mxu0 %v484
    %774 = vmatpush.bf16.msra.mxu0 %v480
    %775 = vmatpush.bf16.msra.mxu0 %v476
    %776 = vmatpush.bf16.msra.mxu0 %v472
    %777 = vmatpush.bf16.msra.mxu0 %v468
    %778 = vmatmul.bf16.gmra.mxu0 %v84
    %v779 = vpop.f32.mrf.mxu0
    %v780 = vadd.f32 %v184, %v779
    %v781 = vpop.f32.mrf.mxu0
    %782 = vdwg.mxu0
    %783 = vmatpush.bf16.msra.mxu0 %v528
    %784 = vmatpush.bf16.msra.mxu0 %v524
    %785 = vmatpush.bf16.msra.mxu0 %v520
    %786 = vmatpush.bf16.msra.mxu0 %v516
    %787 = vmatpush.bf16.msra.mxu0 %v512
    %788 = vmatpush.bf16.msra.mxu0 %v508
    %789 = vmatpush.bf16.msra.mxu0 %v504
    %790 = vmatpush.bf16.msra.mxu0 %v500
    %791 = vmatmul.bf16.gmra.mxu0 %v85
    %v792 = vpop.f32.mrf.mxu0
    %v793 = vadd.f32 %v780, %v792
    %v794 = vpop.f32.mrf.mxu0
    %795 = vdwg.mxu0
    %796 = vmatpush.bf16.msra.mxu0 0
    %797 = vmatpush.bf16.msra.mxu0 %v556
    %798 = vmatpush.bf16.msra.mxu0 %v552
    %799 = vmatpush.bf16.msra.mxu0 %v548
    %800 = vmatpush.bf16.msra.mxu0 %v544
    %801 = vmatpush.bf16.msra.mxu0 %v540
    %802 = vmatpush.bf16.msra.mxu0 %v536
    %803 = vmatpush.bf16.msra.mxu0 %v532
    %804 = vmatmul.bf16.gmra.mxu0 %v651
    %v805 = vpop.f32.mrf.mxu0
    %v806 = vadd.f32 %v793, %v805
    %v807 = vpop.f32.mrf.mxu0
    %808 = vdwg.mxu0
    %v809 = vmax.f32 %v689, 0.0
    %v810 = vmax.f32 %v728, 0.0
    %v811 = vmax.f32 %v767, 0.0
    %v812 = vmax.f32 %v806, 0.0
    %v813 = vpack.c.bf16 %v809, %v809
    %v814 = vpack.c.bf16 %v810, %v810
    %v815 = vpack.c.bf16 %v811, %v811
    %v816 = vpack.c.bf16 %v812, %v812
    %v817 = vld [vmem:[#allocation5] sm:$0xff]
    %v818 = vld [vmem:[#allocation5 + $0x8] sm:$0xff]
    %v819 = vld [vmem:[#allocation5 + $0x10] sm:$0xff]
    %v820 = vld [vmem:[#allocation5 + $0x18] sm:$0xff]
    %v821 = vld [vmem:[#allocation5 + $0x20] sm:$0xff]
    %v822 = vld [vmem:[#allocation5 + $0x28] sm:$0xff]
    %v823 = vld [vmem:[#allocation5 + $0x30] sm:$0xff]
    %v824 = vld [vmem:[#allocation5 + $0x38] sm:$0xff]
    %v825 = vld [vmem:[#allocation5 + $0x40] sm:$0xff]
    %v826 = vld [vmem:[#allocation5 + $0x48] sm:$0xff]
    %v827 = vld [vmem:[#allocation5 + $0x50] sm:$0xff]
    %v828 = vld [vmem:[#allocation5 + $0x58] sm:$0xff]
    %v829 = vld [vmem:[#allocation5 + $0x60] sm:$0xff]
    %v830 = vld [vmem:[#allocation5 + $0x68] sm:$0xff]
    %v831 = vld [vmem:[#allocation5 + $0x70] sm:$0xff]
    %v832 = vld [vmem:[#allocation5 + $0x78] sm:$0xff]
    %v833 = vld [vmem:[#allocation5 + $0x80] sm:$0xff]
    %v834 = vld [vmem:[#allocation5 + $0x88] sm:$0xff]
    %v835 = vld [vmem:[#allocation5 + $0x90] sm:$0xff]
    %v836 = vld [vmem:[#allocation5 + $0x98] sm:$0xff]
    %v837 = vld [vmem:[#allocation5 + $0xa0] sm:$0xff]
    %v838 = vld [vmem:[#allocation5 + $0xa8] sm:$0xff]
    %v839 = vld [vmem:[#allocation5 + $0xb0] sm:$0xff]
    %v840 = vld [vmem:[#allocation5 + $0xb8] sm:$0xff]
    %v841 = vld [vmem:[#allocation5 + $0xc0] sm:$0xff]
    %v842 = vld [vmem:[#allocation5 + $0xc8] sm:$0xff]
    %v843 = vld [vmem:[#allocation5 + $0xd0] sm:$0xff]
    %v844 = vld [vmem:[#allocation5 + $0xd8] sm:$0xff]
    %v845 = vld [vmem:[#allocation5 + $0xe0] sm:$0xff]
    %v846 = vld [vmem:[#allocation5 + $0xe8] sm:$0xff]
    %v847 = vld [vmem:[#allocation5 + $0xf0] sm:$0xff]
    %v848 = vld [vmem:[#allocation5 + $0xf8] sm:$0xff]
    %v849 = vld [vmem:[#allocation5 + $0x100] sm:$0xff]
    %v850 = vld [vmem:[#allocation5 + $0x108] sm:$0xff]
    %v851 = vld [vmem:[#allocation5 + $0x110] sm:$0xff]
    %v852 = vld [vmem:[#allocation5 + $0x118] sm:$0xff]
    %v853 = vld [vmem:[#allocation5 + $0x120] sm:$0xff]
    %v854 = vld [vmem:[#allocation5 + $0x128] sm:$0xff]
    %v855 = vld [vmem:[#allocation5 + $0x130] sm:$0xff]
    %v856 = vld [vmem:[#allocation5 + $0x138] sm:$0xff]
    %v857 = vld [vmem:[#allocation5 + $0x140] sm:$0xff]
    %v858 = vld [vmem:[#allocation5 + $0x148] sm:$0xff]
    %v859 = vld [vmem:[#allocation5 + $0x150] sm:$0xff]
    %v860 = vld [vmem:[#allocation5 + $0x158] sm:$0xff]
    %v861 = vld [vmem:[#allocation5 + $0x160] sm:$0xff]
    %v862 = vld [vmem:[#allocation5 + $0x168] sm:$0xff]
    %v863 = vld [vmem:[#allocation5 + $0x170] sm:$0xff]
    %v864 = vld [vmem:[#allocation5 + $0x178] sm:$0xff]
    %v865 = vld [vmem:[#allocation5 + $0x180] sm:$0xff]
    %v866 = vld [vmem:[#allocation5 + $0x188] sm:$0xff]
    %v867 = vld [vmem:[#allocation5 + $0x190] sm:$0xff]
    %v868 = vld [vmem:[#allocation5 + $0x198] sm:$0xff]
    %v869 = vld [vmem:[#allocation5 + $0x1a0] sm:$0xff]
    %v870 = vld [vmem:[#allocation5 + $0x1a8] sm:$0xff]
    %v871 = vld [vmem:[#allocation5 + $0x1b0] sm:$0xff]
    %v872 = vld [vmem:[#allocation5 + $0x1b8] sm:$0xff]
    %v873 = vld [vmem:[#allocation5 + $0x1c0] sm:$0xff]
    %v874 = vld [vmem:[#allocation5 + $0x1c8] sm:$0xff]
    %v875 = vld [vmem:[#allocation5 + $0x1d0] sm:$0xff]
    %v876 = vld [vmem:[#allocation5 + $0x1d8] sm:$0xff]
    %v877 = vld [vmem:[#allocation5 + $0x1e0] sm:$0xff]
    %v878 = vld [vmem:[#allocation5 + $0x1e8] sm:$0xff]
    %v879 = vld [vmem:[#allocation5 + $0x1f0] sm:$0xff]
    %v880 = vld [vmem:[#allocation5 + $0x1f8] sm:$0xff]
    %v881 = vld [vmem:[#allocation5 + $0x200] sm:$0xff]
    %v882 = vld [vmem:[#allocation5 + $0x208] sm:$0xff]
    %v883 = vld [vmem:[#allocation5 + $0x210] sm:$0xff]
    %v884 = vld [vmem:[#allocation5 + $0x218] sm:$0xff]
    %v885 = vld [vmem:[#allocation5 + $0x220] sm:$0xff]
    %v886 = vld [vmem:[#allocation5 + $0x228] sm:$0xff]
    %v887 = vld [vmem:[#allocation5 + $0x230] sm:$0xff]
    %v888 = vld [vmem:[#allocation5 + $0x238] sm:$0xff]
    %v889 = vld [vmem:[#allocation5 + $0x240] sm:$0xff]
    %v890 = vld [vmem:[#allocation5 + $0x248] sm:$0xff]
    %v891 = vld [vmem:[#allocation5 + $0x250] sm:$0xff]
    %v892 = vld [vmem:[#allocation5 + $0x258] sm:$0xff]
    %v893 = vld [vmem:[#allocation5 + $0x260] sm:$0xff]
    %v894 = vld [vmem:[#allocation5 + $0x268] sm:$0xff]
    %v895 = vld [vmem:[#allocation5 + $0x270] sm:$0xff]
    %v896 = vld [vmem:[#allocation5 + $0x278] sm:$0xff]
    %v897 = vld [vmem:[#allocation5 + $0x280] sm:$0xff]
    %v898 = vld [vmem:[#allocation5 + $0x288] sm:$0xff]
    %v899 = vld [vmem:[#allocation5 + $0x290] sm:$0xff]
    %v900 = vld [vmem:[#allocation5 + $0x298] sm:$0xff]
    %v901 = vld [vmem:[#allocation5 + $0x2a0] sm:$0xff]
    %v902 = vld [vmem:[#allocation5 + $0x2a8] sm:$0xff]
    %v903 = vld [vmem:[#allocation5 + $0x2b0] sm:$0xff]
    %v904 = vld [vmem:[#allocation5 + $0x2b8] sm:$0xff]
    %v905 = vld [vmem:[#allocation5 + $0x2c0] sm:$0xff]
    %v906 = vld [vmem:[#allocation5 + $0x2c8] sm:$0xff]
    %v907 = vld [vmem:[#allocation5 + $0x2d0] sm:$0xff]
    %v908 = vld [vmem:[#allocation5 + $0x2d8] sm:$0xff]
    %v909 = vld [vmem:[#allocation5 + $0x2e0] sm:$0xff]
    %v910 = vld [vmem:[#allocation5 + $0x2e8] sm:$0xff]
    %v911 = vld [vmem:[#allocation5 + $0x2f0] sm:$0xff]
    %v912 = vld [vmem:[#allocation5 + $0x2f8] sm:$0xff]
    %v913 = vld [vmem:[#allocation5 + $0x300] sm:$0xff]
    %v914 = vld [vmem:[#allocation5 + $0x308] sm:$0xff]
    %v915 = vld [vmem:[#allocation5 + $0x310] sm:$0xff]
    %v916 = vld [vmem:[#allocation5 + $0x318] sm:$0xff]
    %v917 = vld [vmem:[#allocation5 + $0x320] sm:$0xff]
    %v918 = vld [vmem:[#allocation5 + $0x328] sm:$0xff]
    %v919 = vld [vmem:[#allocation5 + $0x330] sm:$0xff]
    %v920 = vld [vmem:[#allocation5 + $0x338] sm:$0xff]
    %v921 = vld [vmem:[#allocation5 + $0x340] sm:$0xff]
    %v922 = vld [vmem:[#allocation5 + $0x348] sm:$0xff]
    %v923 = vld [vmem:[#allocation5 + $0x350] sm:$0xff]
    %v924 = vld [vmem:[#allocation5 + $0x358] sm:$0xff]
    %v925 = vld [vmem:[#allocation5 + $0x360] sm:$0xff]
    %v926 = vld [vmem:[#allocation5 + $0x368] sm:$0xff]
    %v927 = vld [vmem:[#allocation5 + $0x370] sm:$0xff]
    %v928 = vld [vmem:[#allocation5 + $0x378] sm:$0xff]
    %v929 = vld [vmem:[#allocation5 + $0x380] sm:$0xff]
    %v930 = vld [vmem:[#allocation5 + $0x388] sm:$0xff]
    %v931 = vld [vmem:[#allocation5 + $0x390] sm:$0xff]
    %v932 = vld [vmem:[#allocation5 + $0x398] sm:$0xff]
    %v933 = vld [vmem:[#allocation5 + $0x3a0] sm:$0xff]
    %v934 = vld [vmem:[#allocation5 + $0x3a8] sm:$0xff]
    %v935 = vld [vmem:[#allocation5 + $0x3b0] sm:$0xff]
    %v936 = vld [vmem:[#allocation5 + $0x3b8] sm:$0xff]
    %v937 = vld [vmem:[#allocation5 + $0x3c0] sm:$0xff]
    %v938 = vld [vmem:[#allocation5 + $0x3c8] sm:$0xff]
    %v939 = vld [vmem:[#allocation5 + $0x3d0] sm:$0xff]
    %v940 = vld [vmem:[#allocation5 + $0x3d8] sm:$0xff]
    %v941 = vld [vmem:[#allocation5 + $0x3e0] sm:$0xff]
    %v942 = vld [vmem:[#allocation5 + $0x3e8] sm:$0xff]
    %v943 = vld [vmem:[#allocation5 + $0x3f0] sm:$0xff]
    %v944 = vld [vmem:[#allocation5 + $0x3f8] sm:$0xff]
    %v945 = vld [vmem:[%s4] sm:$0xf]
    %v947 = vperm.slane %v945, 0
    %v948 = vperm.slane %v945, 1
    %v949 = vperm.slane %v945, 2
    %v950 = vperm.slane %v945, 3
    %v1083 = vunpack.c.l.b16 %v817
    %v1084 = vunpack.c.h.b16 %v817
    %v1085 = vunpack.c.l.b16 %v818
    %v1086 = vunpack.c.h.b16 %v818
    %v1087 = vunpack.c.l.b16 %v819
    %v1088 = vunpack.c.h.b16 %v819
    %v1089 = vunpack.c.l.b16 %v820
    %v1090 = vunpack.c.h.b16 %v820
    %v1091 = vunpack.c.l.b16 %v821
    %v1092 = vunpack.c.h.b16 %v821
    %v1093 = vunpack.c.l.b16 %v822
    %v1094 = vunpack.c.h.b16 %v822
    %v1095 = vunpack.c.l.b16 %v823
    %v1096 = vunpack.c.h.b16 %v823
    %v1097 = vunpack.c.l.b16 %v824
    %v1098 = vunpack.c.h.b16 %v824
    %v1099 = vunpack.c.l.b16 %v825
    %v1100 = vunpack.c.h.b16 %v825
    %v1101 = vunpack.c.l.b16 %v826
    %v1102 = vunpack.c.h.b16 %v826
    %v1103 = vunpack.c.l.b16 %v827
    %v1104 = vunpack.c.h.b16 %v827
    %v1105 = vunpack.c.l.b16 %v828
    %v1106 = vunpack.c.h.b16 %v828
    %v1107 = vunpack.c.l.b16 %v829
    %v1108 = vunpack.c.h.b16 %v829
    %v1109 = vunpack.c.l.b16 %v830
    %v1110 = vunpack.c.h.b16 %v830
    %v1111 = vunpack.c.l.b16 %v831
    %v1112 = vunpack.c.h.b16 %v831
    %v1113 = vunpack.c.l.b16 %v832
    %v1114 = vunpack.c.h.b16 %v832
    %v1115 = vunpack.c.l.b16 %v833
    %v1116 = vunpack.c.h.b16 %v833
    %v1117 = vunpack.c.l.b16 %v834
    %v1118 = vunpack.c.h.b16 %v834
    %v1119 = vunpack.c.l.b16 %v835
    %v1120 = vunpack.c.h.b16 %v835
    %v1121 = vunpack.c.l.b16 %v836
    %v1122 = vunpack.c.h.b16 %v836
    %v1123 = vunpack.c.l.b16 %v837
    %v1124 = vunpack.c.h.b16 %v837
    %v1125 = vunpack.c.l.b16 %v838
    %v1126 = vunpack.c.h.b16 %v838
    %v1127 = vunpack.c.l.b16 %v839
    %v1128 = vunpack.c.h.b16 %v839
    %v1129 = vunpack.c.l.b16 %v840
    %v1130 = vunpack.c.h.b16 %v840
    %v1131 = vunpack.c.l.b16 %v841
    %v1132 = vunpack.c.h.b16 %v841
    %v1133 = vunpack.c.l.b16 %v842
    %v1134 = vunpack.c.h.b16 %v842
    %v1135 = vunpack.c.l.b16 %v843
    %v1136 = vunpack.c.h.b16 %v843
    %v1137 = vunpack.c.l.b16 %v844
    %v1138 = vunpack.c.h.b16 %v844
    %v1139 = vunpack.c.l.b16 %v845
    %v1140 = vunpack.c.h.b16 %v845
    %v1141 = vunpack.c.l.b16 %v846
    %v1142 = vunpack.c.h.b16 %v846
    %v1143 = vunpack.c.l.b16 %v847
    %v1144 = vunpack.c.h.b16 %v847
    %v1145 = vunpack.c.l.b16 %v848
    %v1146 = vunpack.c.h.b16 %v848
    %v1147 = vunpack.c.l.b16 %v849
    %v1148 = vunpack.c.h.b16 %v849
    %v1149 = vunpack.c.l.b16 %v850
    %v1150 = vunpack.c.h.b16 %v850
    %v1151 = vunpack.c.l.b16 %v851
    %v1152 = vunpack.c.h.b16 %v851
    %v1153 = vunpack.c.l.b16 %v852
    %v1154 = vunpack.c.h.b16 %v852
    %v1155 = vunpack.c.l.b16 %v853
    %v1156 = vunpack.c.h.b16 %v853
    %v1157 = vunpack.c.l.b16 %v854
    %v1158 = vunpack.c.h.b16 %v854
    %v1159 = vunpack.c.l.b16 %v855
    %v1160 = vunpack.c.h.b16 %v855
    %v1161 = vunpack.c.l.b16 %v856
    %v1162 = vunpack.c.h.b16 %v856
    %v1163 = vunpack.c.l.b16 %v857
    %v1164 = vunpack.c.h.b16 %v857
    %v1165 = vunpack.c.l.b16 %v858
    %v1166 = vunpack.c.h.b16 %v858
    %v1167 = vunpack.c.l.b16 %v859
    %v1168 = vunpack.c.h.b16 %v859
    %v1169 = vunpack.c.l.b16 %v860
    %v1170 = vunpack.c.h.b16 %v860
    %v1171 = vunpack.c.l.b16 %v861
    %v1172 = vunpack.c.h.b16 %v861
    %v1173 = vunpack.c.l.b16 %v862
    %v1174 = vunpack.c.h.b16 %v862
    %v1175 = vunpack.c.l.b16 %v863
    %v1176 = vunpack.c.h.b16 %v863
    %v1177 = vunpack.c.l.b16 %v864
    %v1178 = vunpack.c.h.b16 %v864
    %v1179 = vunpack.c.l.b16 %v865
    %v1180 = vunpack.c.h.b16 %v865
    %v1181 = vunpack.c.l.b16 %v866
    %v1182 = vunpack.c.h.b16 %v866
    %v1183 = vunpack.c.l.b16 %v867
    %v1184 = vunpack.c.h.b16 %v867
    %v1185 = vunpack.c.l.b16 %v868
    %v1186 = vunpack.c.h.b16 %v868
    %v1187 = vunpack.c.l.b16 %v869
    %v1188 = vunpack.c.h.b16 %v869
    %v1189 = vunpack.c.l.b16 %v870
    %v1190 = vunpack.c.h.b16 %v870
    %v1191 = vunpack.c.l.b16 %v871
    %v1192 = vunpack.c.h.b16 %v871
    %v1193 = vunpack.c.l.b16 %v872
    %v1194 = vunpack.c.h.b16 %v872
    %v1195 = vunpack.c.l.b16 %v873
    %v1196 = vunpack.c.h.b16 %v873
    %v1197 = vunpack.c.l.b16 %v874
    %v1198 = vunpack.c.h.b16 %v874
    %v1199 = vunpack.c.l.b16 %v875
    %v1200 = vunpack.c.h.b16 %v875
    %v1201 = vunpack.c.l.b16 %v876
    %v1202 = vunpack.c.h.b16 %v876
    %v1203 = vunpack.c.l.b16 %v877
    %v1204 = vunpack.c.h.b16 %v877
    %v1205 = vunpack.c.l.b16 %v878
    %v1206 = vunpack.c.h.b16 %v878
    %v1207 = vunpack.c.l.b16 %v879
    %v1208 = vunpack.c.h.b16 %v879
    %v1209 = vunpack.c.l.b16 %v880
    %v1210 = vunpack.c.h.b16 %v880
    %v1211 = vunpack.c.l.b16 %v881
    %v1212 = vunpack.c.h.b16 %v881
    %v1213 = vunpack.c.l.b16 %v882
    %v1214 = vunpack.c.h.b16 %v882
    %v1215 = vunpack.c.l.b16 %v883
    %v1216 = vunpack.c.h.b16 %v883
    %v1217 = vunpack.c.l.b16 %v884
    %v1218 = vunpack.c.h.b16 %v884
    %v1219 = vunpack.c.l.b16 %v885
    %v1220 = vunpack.c.h.b16 %v885
    %v1221 = vunpack.c.l.b16 %v886
    %v1222 = vunpack.c.h.b16 %v886
    %v1223 = vunpack.c.l.b16 %v887
    %v1224 = vunpack.c.h.b16 %v887
    %v1225 = vunpack.c.l.b16 %v888
    %v1226 = vunpack.c.h.b16 %v888
    %v1227 = vunpack.c.l.b16 %v889
    %v1228 = vunpack.c.h.b16 %v889
    %v1229 = vunpack.c.l.b16 %v890
    %v1230 = vunpack.c.h.b16 %v890
    %v1231 = vunpack.c.l.b16 %v891
    %v1232 = vunpack.c.h.b16 %v891
    %v1233 = vunpack.c.l.b16 %v892
    %v1234 = vunpack.c.h.b16 %v892
    %v1235 = vunpack.c.l.b16 %v893
    %v1236 = vunpack.c.h.b16 %v893
    %v1237 = vunpack.c.l.b16 %v894
    %v1238 = vunpack.c.h.b16 %v894
    %v1239 = vunpack.c.l.b16 %v895
    %v1240 = vunpack.c.h.b16 %v895
    %v1241 = vunpack.c.l.b16 %v896
    %v1242 = vunpack.c.h.b16 %v896
    %v1243 = vunpack.c.l.b16 %v897
    %v1244 = vunpack.c.h.b16 %v897
    %v1245 = vunpack.c.l.b16 %v898
    %v1246 = vunpack.c.h.b16 %v898
    %v1247 = vunpack.c.l.b16 %v899
    %v1248 = vunpack.c.h.b16 %v899
    %v1249 = vunpack.c.l.b16 %v900
    %v1250 = vunpack.c.h.b16 %v900
    %v1251 = vunpack.c.l.b16 %v901
    %v1252 = vunpack.c.h.b16 %v901
    %v1253 = vunpack.c.l.b16 %v902
    %v1254 = vunpack.c.h.b16 %v902
    %v1255 = vunpack.c.l.b16 %v903
    %v1256 = vunpack.c.h.b16 %v903
    %v1257 = vunpack.c.l.b16 %v904
    %v1258 = vunpack.c.h.b16 %v904
    %v1259 = vunpack.c.l.b16 %v905
    %v1260 = vunpack.c.h.b16 %v905
    %v1261 = vunpack.c.l.b16 %v906
    %v1262 = vunpack.c.h.b16 %v906
    %v1263 = vunpack.c.l.b16 %v907
    %v1264 = vunpack.c.h.b16 %v907
    %v1265 = vunpack.c.l.b16 %v908
    %v1266 = vunpack.c.h.b16 %v908
    %v1267 = vunpack.c.l.b16 %v909
    %v1268 = vunpack.c.h.b16 %v909
    %v1269 = vunpack.c.l.b16 %v910
    %v1270 = vunpack.c.h.b16 %v910
    %v1271 = vunpack.c.l.b16 %v911
    %v1272 = vunpack.c.h.b16 %v911
    %v1273 = vunpack.c.l.b16 %v912
    %v1274 = vunpack.c.h.b16 %v912
    %v1275 = vunpack.c.l.b16 %v913
    %v1276 = vunpack.c.h.b16 %v913
    %v1277 = vunpack.c.l.b16 %v914
    %v1278 = vunpack.c.h.b16 %v914
    %v1279 = vunpack.c.l.b16 %v915
    %v1280 = vunpack.c.h.b16 %v915
    %v1281 = vunpack.c.l.b16 %v916
    %v1282 = vunpack.c.h.b16 %v916
    %v1283 = vunpack.c.l.b16 %v917
    %v1284 = vunpack.c.h.b16 %v917
    %v1285 = vunpack.c.l.b16 %v918
    %v1286 = vunpack.c.h.b16 %v918
    %v1287 = vunpack.c.l.b16 %v919
    %v1288 = vunpack.c.h.b16 %v919
    %v1289 = vunpack.c.l.b16 %v920
    %v1290 = vunpack.c.h.b16 %v920
    %v1291 = vunpack.c.l.b16 %v921
    %v1292 = vunpack.c.h.b16 %v921
    %v1293 = vunpack.c.l.b16 %v922
    %v1294 = vunpack.c.h.b16 %v922
    %v1295 = vunpack.c.l.b16 %v923
    %v1296 = vunpack.c.h.b16 %v923
    %v1297 = vunpack.c.l.b16 %v924
    %v1298 = vunpack.c.h.b16 %v924
    %v1299 = vunpack.c.l.b16 %v925
    %v1300 = vunpack.c.h.b16 %v925
    %v1301 = vunpack.c.l.b16 %v926
    %v1302 = vunpack.c.h.b16 %v926
    %v1303 = vunpack.c.l.b16 %v927
    %v1304 = vunpack.c.h.b16 %v927
    %v1305 = vunpack.c.l.b16 %v928
    %v1306 = vunpack.c.h.b16 %v928
    %v1307 = vunpack.c.l.b16 %v929
    %v1308 = vunpack.c.h.b16 %v929
    %v1309 = vunpack.c.l.b16 %v930
    %v1310 = vunpack.c.h.b16 %v930
    %v1311 = vunpack.c.l.b16 %v931
    %v1312 = vunpack.c.h.b16 %v931
    %v1313 = vunpack.c.l.b16 %v932
    %v1314 = vunpack.c.h.b16 %v932
    %v1315 = vunpack.c.l.b16 %v933
    %v1316 = vunpack.c.h.b16 %v933
    %v1317 = vunpack.c.l.b16 %v934
    %v1318 = vunpack.c.h.b16 %v934
    %v1319 = vunpack.c.l.b16 %v935
    %v1320 = vunpack.c.h.b16 %v935
    %v1321 = vunpack.c.l.b16 %v936
    %v1322 = vunpack.c.h.b16 %v936
    %v1323 = vunpack.c.l.b16 %v937
    %v1324 = vunpack.c.h.b16 %v937
    %v1325 = vunpack.c.l.b16 %v938
    %v1326 = vunpack.c.h.b16 %v938
    %v1327 = vunpack.c.l.b16 %v939
    %v1328 = vunpack.c.h.b16 %v939
    %v1329 = vunpack.c.l.b16 %v940
    %v1330 = vunpack.c.h.b16 %v940
    %v1331 = vunpack.c.l.b16 %v941
    %v1332 = vunpack.c.h.b16 %v941
    %v1333 = vunpack.c.l.b16 %v942
    %v1334 = vunpack.c.h.b16 %v942
    %v1335 = vunpack.c.l.b16 %v943
    %v1336 = vunpack.c.h.b16 %v943
    %v1337 = vunpack.c.l.b16 %v944
    %v1338 = vunpack.c.h.b16 %v944
    %v1339 = vpack.c.b16 %v1087, %v1083
    %v1340 = vpack.c.b16 %v1088, %v1084
    %v1341 = vpack.c.b16 %v1089, %v1085
    %v1342 = vpack.c.b16 %v1090, %v1086
    %v1343 = vpack.c.b16 %v1095, %v1091
    %v1344 = vpack.c.b16 %v1096, %v1092
    %v1345 = vpack.c.b16 %v1097, %v1093
    %v1346 = vpack.c.b16 %v1098, %v1094
    %v1347 = vpack.c.b16 %v1103, %v1099
    %v1348 = vpack.c.b16 %v1104, %v1100
    %v1349 = vpack.c.b16 %v1105, %v1101
    %v1350 = vpack.c.b16 %v1106, %v1102
    %v1351 = vpack.c.b16 %v1111, %v1107
    %v1352 = vpack.c.b16 %v1112, %v1108
    %v1353 = vpack.c.b16 %v1113, %v1109
    %v1354 = vpack.c.b16 %v1114, %v1110
    %v1355 = vpack.c.b16 %v1119, %v1115
    %v1356 = vpack.c.b16 %v1120, %v1116
    %v1357 = vpack.c.b16 %v1121, %v1117
    %v1358 = vpack.c.b16 %v1122, %v1118
    %v1359 = vpack.c.b16 %v1127, %v1123
    %v1360 = vpack.c.b16 %v1128, %v1124
    %v1361 = vpack.c.b16 %v1129, %v1125
    %v1362 = vpack.c.b16 %v1130, %v1126
    %v1363 = vpack.c.b16 %v1135, %v1131
    %v1364 = vpack.c.b16 %v1136, %v1132
    %v1365 = vpack.c.b16 %v1137, %v1133
    %v1366 = vpack.c.b16 %v1138, %v1134
    %v1367 = vpack.c.b16 %v1143, %v1139
    %v1368 = vpack.c.b16 %v1144, %v1140
    %v1369 = vpack.c.b16 %v1145, %v1141
    %v1370 = vpack.c.b16 %v1146, %v1142
    %v1371 = vpack.c.b16 %v1151, %v1147
    %v1372 = vpack.c.b16 %v1152, %v1148
    %v1373 = vpack.c.b16 %v1153, %v1149
    %v1374 = vpack.c.b16 %v1154, %v1150
    %v1375 = vpack.c.b16 %v1159, %v1155
    %v1376 = vpack.c.b16 %v1160, %v1156
    %v1377 = vpack.c.b16 %v1161, %v1157
    %v1378 = vpack.c.b16 %v1162, %v1158
    %v1379 = vpack.c.b16 %v1167, %v1163
    %v1380 = vpack.c.b16 %v1168, %v1164
    %v1381 = vpack.c.b16 %v1169, %v1165
    %v1382 = vpack.c.b16 %v1170, %v1166
    %v1383 = vpack.c.b16 %v1175, %v1171
    %v1384 = vpack.c.b16 %v1176, %v1172
    %v1385 = vpack.c.b16 %v1177, %v1173
    %v1386 = vpack.c.b16 %v1178, %v1174
    %v1387 = vpack.c.b16 %v1183, %v1179
    %v1388 = vpack.c.b16 %v1184, %v1180
    %v1389 = vpack.c.b16 %v1185, %v1181
    %v1390 = vpack.c.b16 %v1186, %v1182
    %v1391 = vpack.c.b16 %v1191, %v1187
    %v1392 = vpack.c.b16 %v1192, %v1188
    %v1393 = vpack.c.b16 %v1193, %v1189
    %v1394 = vpack.c.b16 %v1194, %v1190
    %v1395 = vpack.c.b16 %v1199, %v1195
    %v1396 = vpack.c.b16 %v1200, %v1196
    %v1397 = vpack.c.b16 %v1201, %v1197
    %v1398 = vpack.c.b16 %v1202, %v1198
    %v1399 = vpack.c.b16 %v1207, %v1203
    %v1400 = vpack.c.b16 %v1208, %v1204
    %v1401 = vpack.c.b16 %v1209, %v1205
    %v1402 = vpack.c.b16 %v1210, %v1206
    %v1403 = vpack.c.b16 %v1215, %v1211
    %v1404 = vpack.c.b16 %v1216, %v1212
    %v1405 = vpack.c.b16 %v1217, %v1213
    %v1406 = vpack.c.b16 %v1218, %v1214
    %v1407 = vpack.c.b16 %v1223, %v1219
    %v1408 = vpack.c.b16 %v1224, %v1220
    %v1409 = vpack.c.b16 %v1225, %v1221
    %v1410 = vpack.c.b16 %v1226, %v1222
    %v1411 = vpack.c.b16 %v1231, %v1227
    %v1412 = vpack.c.b16 %v1232, %v1228
    %v1413 = vpack.c.b16 %v1233, %v1229
    %v1414 = vpack.c.b16 %v1234, %v1230
    %v1415 = vpack.c.b16 %v1239, %v1235
    %v1416 = vpack.c.b16 %v1240, %v1236
    %v1417 = vpack.c.b16 %v1241, %v1237
    %v1418 = vpack.c.b16 %v1242, %v1238
    %v1419 = vpack.c.b16 %v1247, %v1243
    %v1420 = vpack.c.b16 %v1248, %v1244
    %v1421 = vpack.c.b16 %v1249, %v1245
    %v1422 = vpack.c.b16 %v1250, %v1246
    %v1423 = vpack.c.b16 %v1255, %v1251
    %v1424 = vpack.c.b16 %v1256, %v1252
    %v1425 = vpack.c.b16 %v1257, %v1253
    %v1426 = vpack.c.b16 %v1258, %v1254
    %v1427 = vpack.c.b16 %v1263, %v1259
    %v1428 = vpack.c.b16 %v1264, %v1260
    %v1429 = vpack.c.b16 %v1265, %v1261
    %v1430 = vpack.c.b16 %v1266, %v1262
    %v1431 = vpack.c.b16 %v1271, %v1267
    %v1432 = vpack.c.b16 %v1272, %v1268
    %v1433 = vpack.c.b16 %v1273, %v1269
    %v1434 = vpack.c.b16 %v1274, %v1270
    %v1435 = vpack.c.b16 %v1279, %v1275
    %v1436 = vpack.c.b16 %v1280, %v1276
    %v1437 = vpack.c.b16 %v1281, %v1277
    %v1438 = vpack.c.b16 %v1282, %v1278
    %v1439 = vpack.c.b16 %v1287, %v1283
    %v1440 = vpack.c.b16 %v1288, %v1284
    %v1441 = vpack.c.b16 %v1289, %v1285
    %v1442 = vpack.c.b16 %v1290, %v1286
    %v1443 = vpack.c.b16 %v1295, %v1291
    %v1444 = vpack.c.b16 %v1296, %v1292
    %v1445 = vpack.c.b16 %v1297, %v1293
    %v1446 = vpack.c.b16 %v1298, %v1294
    %v1447 = vpack.c.b16 %v1303, %v1299
    %v1448 = vpack.c.b16 %v1304, %v1300
    %v1449 = vpack.c.b16 %v1305, %v1301
    %v1450 = vpack.c.b16 %v1306, %v1302
    %v1451 = vpack.c.b16 %v1311, %v1307
    %v1452 = vpack.c.b16 %v1312, %v1308
    %v1453 = vpack.c.b16 %v1313, %v1309
    %v1454 = vpack.c.b16 %v1314, %v1310
    %v1455 = vpack.c.b16 %v1319, %v1315
    %v1456 = vpack.c.b16 %v1320, %v1316
    %v1457 = vpack.c.b16 %v1321, %v1317
    %v1458 = vpack.c.b16 %v1322, %v1318
    %v1459 = vpack.c.b16 %v1327, %v1323
    %v1460 = vpack.c.b16 %v1328, %v1324
    %v1461 = vpack.c.b16 %v1329, %v1325
    %v1462 = vpack.c.b16 %v1330, %v1326
    %v1463 = vpack.c.b16 %v1335, %v1331
    %v1464 = vpack.c.b16 %v1336, %v1332
    %v1465 = vpack.c.b16 %v1337, %v1333
    %v1466 = vpack.c.b16 %v1338, %v1334
    %1595 = vmatpush.bf16.msra.mxu0 %v1367
    %1596 = vmatpush.bf16.msra.mxu0 %v1363
    %1597 = vmatpush.bf16.msra.mxu0 %v1359
    %1598 = vmatpush.bf16.msra.mxu0 %v1355
    %1599 = vmatpush.bf16.msra.mxu0 %v1351
    %1600 = vmatpush.bf16.msra.mxu0 %v1347
    %1601 = vmatpush.bf16.msra.mxu0 %v1343
    %1602 = vmatpush.bf16.msra.mxu0 %v1339
    %1603 = vmatmul.bf16.gmra.mxu0 %v813
    %v1604 = vpop.f32.mrf.mxu0
    %v1605 = vadd.f32 %v947, %v1604
    %v1606 = vpop.f32.mrf.mxu0
    %1607 = vdwg.mxu0
    %1608 = vmatpush.bf16.msra.mxu0 %v1399
    %1609 = vmatpush.bf16.msra.mxu0 %v1395
    %1610 = vmatpush.bf16.msra.mxu0 %v1391
    %1611 = vmatpush.bf16.msra.mxu0 %v1387
    %1612 = vmatpush.bf16.msra.mxu0 %v1383
    %1613 = vmatpush.bf16.msra.mxu0 %v1379
    %1614 = vmatpush.bf16.msra.mxu0 %v1375
    %1615 = vmatpush.bf16.msra.mxu0 %v1371
    %1616 = vmatmul.bf16.gmra.mxu0 %v814
    %v1617 = vpop.f32.mrf.mxu0
    %v1618 = vadd.f32 %v1605, %v1617
    %v1619 = vpop.f32.mrf.mxu0
    %1620 = vdwg.mxu0
    %1621 = vmatpush.bf16.msra.mxu0 %v1431
    %1622 = vmatpush.bf16.msra.mxu0 %v1427
    %1623 = vmatpush.bf16.msra.mxu0 %v1423
    %1624 = vmatpush.bf16.msra.mxu0 %v1419
    %1625 = vmatpush.bf16.msra.mxu0 %v1415
    %1626 = vmatpush.bf16.msra.mxu0 %v1411
    %1627 = vmatpush.bf16.msra.mxu0 %v1407
    %1628 = vmatpush.bf16.msra.mxu0 %v1403
    %1629 = vmatmul.bf16.gmra.mxu0 %v815
    %v1630 = vpop.f32.mrf.mxu0
    %v1631 = vadd.f32 %v1618, %v1630
    %v1632 = vpop.f32.mrf.mxu0
    %1633 = vdwg.mxu0
    %1634 = vmatpush.bf16.msra.mxu0 %v1463
    %1635 = vmatpush.bf16.msra.mxu0 %v1459
    %1636 = vmatpush.bf16.msra.mxu0 %v1455
    %1637 = vmatpush.bf16.msra.mxu0 %v1451
    %1638 = vmatpush.bf16.msra.mxu0 %v1447
    %1639 = vmatpush.bf16.msra.mxu0 %v1443
    %1640 = vmatpush.bf16.msra.mxu0 %v1439
    %1641 = vmatpush.bf16.msra.mxu0 %v1435
    %1642 = vmatmul.bf16.gmra.mxu0 %v816
    %v1643 = vpop.f32.mrf.mxu0
    %v1644 = vadd.f32 %v1631, %v1643
    %v1645 = vpop.f32.mrf.mxu0
    %1646 = vdwg.mxu0
    %1647 = vmatpush.bf16.msra.mxu0 %v1368
    %1648 = vmatpush.bf16.msra.mxu0 %v1364
    %1649 = vmatpush.bf16.msra.mxu0 %v1360
    %1650 = vmatpush.bf16.msra.mxu0 %v1356
    %1651 = vmatpush.bf16.msra.mxu0 %v1352
    %1652 = vmatpush.bf16.msra.mxu0 %v1348
    %1653 = vmatpush.bf16.msra.mxu0 %v1344
    %1654 = vmatpush.bf16.msra.mxu0 %v1340
    %1655 = vmatmul.bf16.gmra.mxu0 %v813
    %v1656 = vpop.f32.mrf.mxu0
    %v1657 = vadd.f32 %v948, %v1656
    %v1658 = vpop.f32.mrf.mxu0
    %1659 = vdwg.mxu0
    %1660 = vmatpush.bf16.msra.mxu0 %v1400
    %1661 = vmatpush.bf16.msra.mxu0 %v1396
    %1662 = vmatpush.bf16.msra.mxu0 %v1392
    %1663 = vmatpush.bf16.msra.mxu0 %v1388
    %1664 = vmatpush.bf16.msra.mxu0 %v1384
    %1665 = vmatpush.bf16.msra.mxu0 %v1380
    %1666 = vmatpush.bf16.msra.mxu0 %v1376
    %1667 = vmatpush.bf16.msra.mxu0 %v1372
    %1668 = vmatmul.bf16.gmra.mxu0 %v814
    %v1669 = vpop.f32.mrf.mxu0
    %v1670 = vadd.f32 %v1657, %v1669
    %v1671 = vpop.f32.mrf.mxu0
    %1672 = vdwg.mxu0
    %1673 = vmatpush.bf16.msra.mxu0 %v1432
    %1674 = vmatpush.bf16.msra.mxu0 %v1428
    %1675 = vmatpush.bf16.msra.mxu0 %v1424
    %1676 = vmatpush.bf16.msra.mxu0 %v1420
    %1677 = vmatpush.bf16.msra.mxu0 %v1416
    %1678 = vmatpush.bf16.msra.mxu0 %v1412
    %1679 = vmatpush.bf16.msra.mxu0 %v1408
    %1680 = vmatpush.bf16.msra.mxu0 %v1404
    %1681 = vmatmul.bf16.gmra.mxu0 %v815
    %v1682 = vpop.f32.mrf.mxu0
    %v1683 = vadd.f32 %v1670, %v1682
    %v1684 = vpop.f32.mrf.mxu0
    %1685 = vdwg.mxu0
    %1686 = vmatpush.bf16.msra.mxu0 %v1464
    %1687 = vmatpush.bf16.msra.mxu0 %v1460
    %1688 = vmatpush.bf16.msra.mxu0 %v1456
    %1689 = vmatpush.bf16.msra.mxu0 %v1452
    %1690 = vmatpush.bf16.msra.mxu0 %v1448
    %1691 = vmatpush.bf16.msra.mxu0 %v1444
    %1692 = vmatpush.bf16.msra.mxu0 %v1440
    %1693 = vmatpush.bf16.msra.mxu0 %v1436
    %1694 = vmatmul.bf16.gmra.mxu0 %v816
    %v1695 = vpop.f32.mrf.mxu0
    %v1696 = vadd.f32 %v1683, %v1695
    %v1697 = vpop.f32.mrf.mxu0
    %1698 = vdwg.mxu0
    %1699 = vmatpush.bf16.msra.mxu0 %v1369
    %1700 = vmatpush.bf16.msra.mxu0 %v1365
    %1701 = vmatpush.bf16.msra.mxu0 %v1361
    %1702 = vmatpush.bf16.msra.mxu0 %v1357
    %1703 = vmatpush.bf16.msra.mxu0 %v1353
    %1704 = vmatpush.bf16.msra.mxu0 %v1349
    %1705 = vmatpush.bf16.msra.mxu0 %v1345
    %1706 = vmatpush.bf16.msra.mxu0 %v1341
    %1707 = vmatmul.bf16.gmra.mxu0 %v813
    %v1708 = vpop.f32.mrf.mxu0
    %v1709 = vadd.f32 %v949, %v1708
    %v1710 = vpop.f32.mrf.mxu0
    %1711 = vdwg.mxu0
    %1712 = vmatpush.bf16.msra.mxu0 %v1401
    %1713 = vmatpush.bf16.msra.mxu0 %v1397
    %1714 = vmatpush.bf16.msra.mxu0 %v1393
    %1715 = vmatpush.bf16.msra.mxu0 %v1389
    %1716 = vmatpush.bf16.msra.mxu0 %v1385
    %1717 = vmatpush.bf16.msra.mxu0 %v1381
    %1718 = vmatpush.bf16.msra.mxu0 %v1377
    %1719 = vmatpush.bf16.msra.mxu0 %v1373
    %1720 = vmatmul.bf16.gmra.mxu0 %v814
    %v1721 = vpop.f32.mrf.mxu0
    %v1722 = vadd.f32 %v1709, %v1721
    %v1723 = vpop.f32.mrf.mxu0
    %1724 = vdwg.mxu0
    %1725 = vmatpush.bf16.msra.mxu0 %v1433
    %1726 = vmatpush.bf16.msra.mxu0 %v1429
    %1727 = vmatpush.bf16.msra.mxu0 %v1425
    %1728 = vmatpush.bf16.msra.mxu0 %v1421
    %1729 = vmatpush.bf16.msra.mxu0 %v1417
    %1730 = vmatpush.bf16.msra.mxu0 %v1413
    %1731 = vmatpush.bf16.msra.mxu0 %v1409
    %1732 = vmatpush.bf16.msra.mxu0 %v1405
    %1733 = vmatmul.bf16.gmra.mxu0 %v815
    %v1734 = vpop.f32.mrf.mxu0
    %v1735 = vadd.f32 %v1722, %v1734
    %v1736 = vpop.f32.mrf.mxu0
    %1737 = vdwg.mxu0
    %1738 = vmatpush.bf16.msra.mxu0 %v1465
    %1739 = vmatpush.bf16.msra.mxu0 %v1461
    %1740 = vmatpush.bf16.msra.mxu0 %v1457
    %1741 = vmatpush.bf16.msra.mxu0 %v1453
    %1742 = vmatpush.bf16.msra.mxu0 %v1449
    %1743 = vmatpush.bf16.msra.mxu0 %v1445
    %1744 = vmatpush.bf16.msra.mxu0 %v1441
    %1745 = vmatpush.bf16.msra.mxu0 %v1437
    %1746 = vmatmul.bf16.gmra.mxu0 %v816
    %v1747 = vpop.f32.mrf.mxu0
    %v1748 = vadd.f32 %v1735, %v1747
    %v1749 = vpop.f32.mrf.mxu0
    %1750 = vdwg.mxu0
    %1751 = vmatpush.bf16.msra.mxu0 %v1370
    %1752 = vmatpush.bf16.msra.mxu0 %v1366
    %1753 = vmatpush.bf16.msra.mxu0 %v1362
    %1754 = vmatpush.bf16.msra.mxu0 %v1358
    %1755 = vmatpush.bf16.msra.mxu0 %v1354
    %1756 = vmatpush.bf16.msra.mxu0 %v1350
    %1757 = vmatpush.bf16.msra.mxu0 %v1346
    %1758 = vmatpush.bf16.msra.mxu0 %v1342
    %1759 = vmatmul.bf16.gmra.mxu0 %v813
    %v1760 = vpop.f32.mrf.mxu0
    %v1761 = vadd.f32 %v950, %v1760
    %v1762 = vpop.f32.mrf.mxu0
    %1763 = vdwg.mxu0
    %1764 = vmatpush.bf16.msra.mxu0 %v1402
    %1765 = vmatpush.bf16.msra.mxu0 %v1398
    %1766 = vmatpush.bf16.msra.mxu0 %v1394
    %1767 = vmatpush.bf16.msra.mxu0 %v1390
    %1768 = vmatpush.bf16.msra.mxu0 %v1386
    %1769 = vmatpush.bf16.msra.mxu0 %v1382
    %1770 = vmatpush.bf16.msra.mxu0 %v1378
    %1771 = vmatpush.bf16.msra.mxu0 %v1374
    %1772 = vmatmul.bf16.gmra.mxu0 %v814
    %v1773 = vpop.f32.mrf.mxu0
    %v1774 = vadd.f32 %v1761, %v1773
    %v1775 = vpop.f32.mrf.mxu0
    %1776 = vdwg.mxu0
    %1777 = vmatpush.bf16.msra.mxu0 %v1434
    %1778 = vmatpush.bf16.msra.mxu0 %v1430
    %1779 = vmatpush.bf16.msra.mxu0 %v1426
    %1780 = vmatpush.bf16.msra.mxu0 %v1422
    %1781 = vmatpush.bf16.msra.mxu0 %v1418
    %1782 = vmatpush.bf16.msra.mxu0 %v1414
    %1783 = vmatpush.bf16.msra.mxu0 %v1410
    %1784 = vmatpush.bf16.msra.mxu0 %v1406
    %1785 = vmatmul.bf16.gmra.mxu0 %v815
    %v1786 = vpop.f32.mrf.mxu0
    %v1787 = vadd.f32 %v1774, %v1786
    %v1788 = vpop.f32.mrf.mxu0
    %1789 = vdwg.mxu0
    %1790 = vmatpush.bf16.msra.mxu0 %v1466
    %1791 = vmatpush.bf16.msra.mxu0 %v1462
    %1792 = vmatpush.bf16.msra.mxu0 %v1458
    %1793 = vmatpush.bf16.msra.mxu0 %v1454
    %1794 = vmatpush.bf16.msra.mxu0 %v1450
    %1795 = vmatpush.bf16.msra.mxu0 %v1446
    %1796 = vmatpush.bf16.msra.mxu0 %v1442
    %1797 = vmatpush.bf16.msra.mxu0 %v1438
    %1798 = vmatmul.bf16.gmra.mxu0 %v816
    %v1799 = vpop.f32.mrf.mxu0
    %v1800 = vadd.f32 %v1787, %v1799
    %v1801 = vpop.f32.mrf.mxu0
    %1802 = vdwg.mxu0
    %v1803 = vmax.f32 %v1644, 0.0
    %v1804 = vmax.f32 %v1696, 0.0
    %v1805 = vmax.f32 %v1748, 0.0
    %v1806 = vmax.f32 %v1800, 0.0
    %v1807 = vpack.c.bf16 %v1803, %v1803
    %v1808 = vpack.c.bf16 %v1804, %v1804
    %v1809 = vpack.c.bf16 %v1805, %v1805
    %v1810 = vpack.c.bf16 %v1806, %v1806
    %v1811 = vld [vmem:[#allocation7] sm:$0xff]
    %v1812 = vld [vmem:[#allocation7 + $0x8] sm:$0xff]
    %v1813 = vld [vmem:[#allocation7 + $0x10] sm:$0xff]
    %v1814 = vld [vmem:[#allocation7 + $0x18] sm:$0xff]
    %v1815 = vld [vmem:[#allocation7 + $0x20] sm:$0xff]
    %v1816 = vld [vmem:[#allocation7 + $0x28] sm:$0xff]
    %v1817 = vld [vmem:[#allocation7 + $0x30] sm:$0xff]
    %v1818 = vld [vmem:[#allocation7 + $0x38] sm:$0xff]
    %v1819 = vld [vmem:[#allocation7 + $0x40] sm:$0xff]
    %v1820 = vld [vmem:[#allocation7 + $0x48] sm:$0xff]
    %v1821 = vld [vmem:[#allocation7 + $0x50] sm:$0xff]
    %v1822 = vld [vmem:[#allocation7 + $0x58] sm:$0xff]
    %v1823 = vld [vmem:[#allocation7 + $0x60] sm:$0xff]
    %v1824 = vld [vmem:[#allocation7 + $0x68] sm:$0xff]
    %v1825 = vld [vmem:[#allocation7 + $0x70] sm:$0xff]
    %v1826 = vld [vmem:[#allocation7 + $0x78] sm:$0xff]
    %v1827 = vld [vmem:[#allocation7 + $0x80] sm:$0xff]
    %v1828 = vld [vmem:[#allocation7 + $0x88] sm:$0xff]
    %v1829 = vld [vmem:[#allocation7 + $0x90] sm:$0xff]
    %v1830 = vld [vmem:[#allocation7 + $0x98] sm:$0xff]
    %v1831 = vld [vmem:[#allocation7 + $0xa0] sm:$0xff]
    %v1832 = vld [vmem:[#allocation7 + $0xa8] sm:$0xff]
    %v1833 = vld [vmem:[#allocation7 + $0xb0] sm:$0xff]
    %v1834 = vld [vmem:[#allocation7 + $0xb8] sm:$0xff]
    %v1835 = vld [vmem:[#allocation7 + $0xc0] sm:$0xff]
    %v1836 = vld [vmem:[#allocation7 + $0xc8] sm:$0xff]
    %v1837 = vld [vmem:[#allocation7 + $0xd0] sm:$0xff]
    %v1838 = vld [vmem:[#allocation7 + $0xd8] sm:$0xff]
    %v1839 = vld [vmem:[#allocation7 + $0xe0] sm:$0xff]
    %v1840 = vld [vmem:[#allocation7 + $0xe8] sm:$0xff]
    %v1841 = vld [vmem:[#allocation7 + $0xf0] sm:$0xff]
    %v1842 = vld [vmem:[#allocation7 + $0xf8] sm:$0xff]
    %v1843 = vld [vmem:[#allocation7 + $0x100] sm:$0xff]
    %v1844 = vld [vmem:[#allocation7 + $0x108] sm:$0xff]
    %v1845 = vld [vmem:[#allocation7 + $0x110] sm:$0xff]
    %v1846 = vld [vmem:[#allocation7 + $0x118] sm:$0xff]
    %v1847 = vld [vmem:[#allocation7 + $0x120] sm:$0xff]
    %v1848 = vld [vmem:[#allocation7 + $0x128] sm:$0xff]
    %v1849 = vld [vmem:[#allocation7 + $0x130] sm:$0xff]
    %v1850 = vld [vmem:[#allocation7 + $0x138] sm:$0xff]
    %v1851 = vld [vmem:[#allocation7 + $0x140] sm:$0xff]
    %v1852 = vld [vmem:[#allocation7 + $0x148] sm:$0xff]
    %v1853 = vld [vmem:[#allocation7 + $0x150] sm:$0xff]
    %v1854 = vld [vmem:[#allocation7 + $0x158] sm:$0xff]
    %v1855 = vld [vmem:[#allocation7 + $0x160] sm:$0xff]
    %v1856 = vld [vmem:[#allocation7 + $0x168] sm:$0xff]
    %v1857 = vld [vmem:[#allocation7 + $0x170] sm:$0xff]
    %v1858 = vld [vmem:[#allocation7 + $0x178] sm:$0xff]
    %v1859 = vld [vmem:[#allocation7 + $0x180] sm:$0xff]
    %v1860 = vld [vmem:[#allocation7 + $0x188] sm:$0xff]
    %v1861 = vld [vmem:[#allocation7 + $0x190] sm:$0xff]
    %v1862 = vld [vmem:[#allocation7 + $0x198] sm:$0xff]
    %v1863 = vld [vmem:[#allocation7 + $0x1a0] sm:$0xff]
    %v1864 = vld [vmem:[#allocation7 + $0x1a8] sm:$0xff]
    %v1865 = vld [vmem:[#allocation7 + $0x1b0] sm:$0xff]
    %v1866 = vld [vmem:[#allocation7 + $0x1b8] sm:$0xff]
    %v1867 = vld [vmem:[#allocation7 + $0x1c0] sm:$0xff]
    %v1868 = vld [vmem:[#allocation7 + $0x1c8] sm:$0xff]
    %v1869 = vld [vmem:[#allocation7 + $0x1d0] sm:$0xff]
    %v1870 = vld [vmem:[#allocation7 + $0x1d8] sm:$0xff]
    %v1871 = vld [vmem:[#allocation7 + $0x1e0] sm:$0xff]
    %v1872 = vld [vmem:[#allocation7 + $0x1e8] sm:$0xff]
    %v1873 = vld [vmem:[#allocation7 + $0x1f0] sm:$0xff]
    %v1874 = vld [vmem:[#allocation7 + $0x1f8] sm:$0xff]
    %v1875 = vld [vmem:[#allocation7 + $0x200] sm:$0xff]
    %v1876 = vld [vmem:[#allocation7 + $0x208] sm:$0xff]
    %v1877 = vld [vmem:[#allocation7 + $0x210] sm:$0xff]
    %v1878 = vld [vmem:[#allocation7 + $0x218] sm:$0xff]
    %v1879 = vld [vmem:[#allocation7 + $0x220] sm:$0xff]
    %v1880 = vld [vmem:[#allocation7 + $0x228] sm:$0xff]
    %v1881 = vld [vmem:[#allocation7 + $0x230] sm:$0xff]
    %v1882 = vld [vmem:[#allocation7 + $0x238] sm:$0xff]
    %v1883 = vld [vmem:[#allocation7 + $0x240] sm:$0xff]
    %v1884 = vld [vmem:[#allocation7 + $0x248] sm:$0xff]
    %v1885 = vld [vmem:[#allocation7 + $0x250] sm:$0xff]
    %v1886 = vld [vmem:[#allocation7 + $0x258] sm:$0xff]
    %v1887 = vld [vmem:[#allocation7 + $0x260] sm:$0xff]
    %v1888 = vld [vmem:[#allocation7 + $0x268] sm:$0xff]
    %v1889 = vld [vmem:[#allocation7 + $0x270] sm:$0xff]
    %v1890 = vld [vmem:[#allocation7 + $0x278] sm:$0xff]
    %v1891 = vld [vmem:[#allocation7 + $0x280] sm:$0xff]
    %v1892 = vld [vmem:[#allocation7 + $0x288] sm:$0xff]
    %v1893 = vld [vmem:[#allocation7 + $0x290] sm:$0xff]
    %v1894 = vld [vmem:[#allocation7 + $0x298] sm:$0xff]
    %v1895 = vld [vmem:[#allocation7 + $0x2a0] sm:$0xff]
    %v1896 = vld [vmem:[#allocation7 + $0x2a8] sm:$0xff]
    %v1897 = vld [vmem:[#allocation7 + $0x2b0] sm:$0xff]
    %v1898 = vld [vmem:[#allocation7 + $0x2b8] sm:$0xff]
    %v1899 = vld [vmem:[#allocation7 + $0x2c0] sm:$0xff]
    %v1900 = vld [vmem:[#allocation7 + $0x2c8] sm:$0xff]
    %v1901 = vld [vmem:[#allocation7 + $0x2d0] sm:$0xff]
    %v1902 = vld [vmem:[#allocation7 + $0x2d8] sm:$0xff]
    %v1903 = vld [vmem:[#allocation7 + $0x2e0] sm:$0xff]
    %v1904 = vld [vmem:[#allocation7 + $0x2e8] sm:$0xff]
    %v1905 = vld [vmem:[#allocation7 + $0x2f0] sm:$0xff]
    %v1906 = vld [vmem:[#allocation7 + $0x2f8] sm:$0xff]
    %v1907 = vld [vmem:[#allocation7 + $0x300] sm:$0xff]
    %v1908 = vld [vmem:[#allocation7 + $0x308] sm:$0xff]
    %v1909 = vld [vmem:[#allocation7 + $0x310] sm:$0xff]
    %v1910 = vld [vmem:[#allocation7 + $0x318] sm:$0xff]
    %v1911 = vld [vmem:[#allocation7 + $0x320] sm:$0xff]
    %v1912 = vld [vmem:[#allocation7 + $0x328] sm:$0xff]
    %v1913 = vld [vmem:[#allocation7 + $0x330] sm:$0xff]
    %v1914 = vld [vmem:[#allocation7 + $0x338] sm:$0xff]
    %v1915 = vld [vmem:[#allocation7 + $0x340] sm:$0xff]
    %v1916 = vld [vmem:[#allocation7 + $0x348] sm:$0xff]
    %v1917 = vld [vmem:[#allocation7 + $0x350] sm:$0xff]
    %v1918 = vld [vmem:[#allocation7 + $0x358] sm:$0xff]
    %v1919 = vld [vmem:[#allocation7 + $0x360] sm:$0xff]
    %v1920 = vld [vmem:[#allocation7 + $0x368] sm:$0xff]
    %v1921 = vld [vmem:[#allocation7 + $0x370] sm:$0xff]
    %v1922 = vld [vmem:[#allocation7 + $0x378] sm:$0xff]
    %v1923 = vld [vmem:[#allocation7 + $0x380] sm:$0xff]
    %v1924 = vld [vmem:[#allocation7 + $0x388] sm:$0xff]
    %v1925 = vld [vmem:[#allocation7 + $0x390] sm:$0xff]
    %v1926 = vld [vmem:[#allocation7 + $0x398] sm:$0xff]
    %v1927 = vld [vmem:[#allocation7 + $0x3a0] sm:$0xff]
    %v1928 = vld [vmem:[#allocation7 + $0x3a8] sm:$0xff]
    %v1929 = vld [vmem:[#allocation7 + $0x3b0] sm:$0xff]
    %v1930 = vld [vmem:[#allocation7 + $0x3b8] sm:$0xff]
    %v1931 = vld [vmem:[#allocation7 + $0x3c0] sm:$0xff]
    %v1932 = vld [vmem:[#allocation7 + $0x3c8] sm:$0xff]
    %v1933 = vld [vmem:[#allocation7 + $0x3d0] sm:$0xff]
    %v1934 = vld [vmem:[#allocation7 + $0x3d8] sm:$0xff]
    %v1935 = vld [vmem:[#allocation7 + $0x3e0] sm:$0xff]
    %v1936 = vld [vmem:[#allocation7 + $0x3e8] sm:$0xff]
    %v1937 = vld [vmem:[#allocation7 + $0x3f0] sm:$0xff]
    %v1938 = vld [vmem:[#allocation7 + $0x3f8] sm:$0xff]
    %v1939 = vld [vmem:[%s6] sm:$0xf]
    %v1941 = vperm.slane %v1939, 0
    %v1942 = vperm.slane %v1939, 1
    %v1943 = vperm.slane %v1939, 2
    %v1944 = vperm.slane %v1939, 3
    %v2077 = vunpack.c.l.b16 %v1811
    %v2078 = vunpack.c.h.b16 %v1811
    %v2079 = vunpack.c.l.b16 %v1812
    %v2080 = vunpack.c.h.b16 %v1812
    %v2081 = vunpack.c.l.b16 %v1813
    %v2082 = vunpack.c.h.b16 %v1813
    %v2083 = vunpack.c.l.b16 %v1814
    %v2084 = vunpack.c.h.b16 %v1814
    %v2085 = vunpack.c.l.b16 %v1815
    %v2086 = vunpack.c.h.b16 %v1815
    %v2087 = vunpack.c.l.b16 %v1816
    %v2088 = vunpack.c.h.b16 %v1816
    %v2089 = vunpack.c.l.b16 %v1817
    %v2090 = vunpack.c.h.b16 %v1817
    %v2091 = vunpack.c.l.b16 %v1818
    %v2092 = vunpack.c.h.b16 %v1818
    %v2093 = vunpack.c.l.b16 %v1819
    %v2094 = vunpack.c.h.b16 %v1819
    %v2095 = vunpack.c.l.b16 %v1820
    %v2096 = vunpack.c.h.b16 %v1820
    %v2097 = vunpack.c.l.b16 %v1821
    %v2098 = vunpack.c.h.b16 %v1821
    %v2099 = vunpack.c.l.b16 %v1822
    %v2100 = vunpack.c.h.b16 %v1822
    %v2101 = vunpack.c.l.b16 %v1823
    %v2102 = vunpack.c.h.b16 %v1823
    %v2103 = vunpack.c.l.b16 %v1824
    %v2104 = vunpack.c.h.b16 %v1824
    %v2105 = vunpack.c.l.b16 %v1825
    %v2106 = vunpack.c.h.b16 %v1825
    %v2107 = vunpack.c.l.b16 %v1826
    %v2108 = vunpack.c.h.b16 %v1826
    %v2109 = vunpack.c.l.b16 %v1827
    %v2110 = vunpack.c.h.b16 %v1827
    %v2111 = vunpack.c.l.b16 %v1828
    %v2112 = vunpack.c.h.b16 %v1828
    %v2113 = vunpack.c.l.b16 %v1829
    %v2114 = vunpack.c.h.b16 %v1829
    %v2115 = vunpack.c.l.b16 %v1830
    %v2116 = vunpack.c.h.b16 %v1830
    %v2117 = vunpack.c.l.b16 %v1831
    %v2118 = vunpack.c.h.b16 %v1831
    %v2119 = vunpack.c.l.b16 %v1832
    %v2120 = vunpack.c.h.b16 %v1832
    %v2121 = vunpack.c.l.b16 %v1833
    %v2122 = vunpack.c.h.b16 %v1833
    %v2123 = vunpack.c.l.b16 %v1834
    %v2124 = vunpack.c.h.b16 %v1834
    %v2125 = vunpack.c.l.b16 %v1835
    %v2126 = vunpack.c.h.b16 %v1835
    %v2127 = vunpack.c.l.b16 %v1836
    %v2128 = vunpack.c.h.b16 %v1836
    %v2129 = vunpack.c.l.b16 %v1837
    %v2130 = vunpack.c.h.b16 %v1837
    %v2131 = vunpack.c.l.b16 %v1838
    %v2132 = vunpack.c.h.b16 %v1838
    %v2133 = vunpack.c.l.b16 %v1839
    %v2134 = vunpack.c.h.b16 %v1839
    %v2135 = vunpack.c.l.b16 %v1840
    %v2136 = vunpack.c.h.b16 %v1840
    %v2137 = vunpack.c.l.b16 %v1841
    %v2138 = vunpack.c.h.b16 %v1841
    %v2139 = vunpack.c.l.b16 %v1842
    %v2140 = vunpack.c.h.b16 %v1842
    %v2141 = vunpack.c.l.b16 %v1843
    %v2142 = vunpack.c.h.b16 %v1843
    %v2143 = vunpack.c.l.b16 %v1844
    %v2144 = vunpack.c.h.b16 %v1844
    %v2145 = vunpack.c.l.b16 %v1845
    %v2146 = vunpack.c.h.b16 %v1845
    %v2147 = vunpack.c.l.b16 %v1846
    %v2148 = vunpack.c.h.b16 %v1846
    %v2149 = vunpack.c.l.b16 %v1847
    %v2150 = vunpack.c.h.b16 %v1847
    %v2151 = vunpack.c.l.b16 %v1848
    %v2152 = vunpack.c.h.b16 %v1848
    %v2153 = vunpack.c.l.b16 %v1849
    %v2154 = vunpack.c.h.b16 %v1849
    %v2155 = vunpack.c.l.b16 %v1850
    %v2156 = vunpack.c.h.b16 %v1850
    %v2157 = vunpack.c.l.b16 %v1851
    %v2158 = vunpack.c.h.b16 %v1851
    %v2159 = vunpack.c.l.b16 %v1852
    %v2160 = vunpack.c.h.b16 %v1852
    %v2161 = vunpack.c.l.b16 %v1853
    %v2162 = vunpack.c.h.b16 %v1853
    %v2163 = vunpack.c.l.b16 %v1854
    %v2164 = vunpack.c.h.b16 %v1854
    %v2165 = vunpack.c.l.b16 %v1855
    %v2166 = vunpack.c.h.b16 %v1855
    %v2167 = vunpack.c.l.b16 %v1856
    %v2168 = vunpack.c.h.b16 %v1856
    %v2169 = vunpack.c.l.b16 %v1857
    %v2170 = vunpack.c.h.b16 %v1857
    %v2171 = vunpack.c.l.b16 %v1858
    %v2172 = vunpack.c.h.b16 %v1858
    %v2173 = vunpack.c.l.b16 %v1859
    %v2174 = vunpack.c.h.b16 %v1859
    %v2175 = vunpack.c.l.b16 %v1860
    %v2176 = vunpack.c.h.b16 %v1860
    %v2177 = vunpack.c.l.b16 %v1861
    %v2178 = vunpack.c.h.b16 %v1861
    %v2179 = vunpack.c.l.b16 %v1862
    %v2180 = vunpack.c.h.b16 %v1862
    %v2181 = vunpack.c.l.b16 %v1863
    %v2182 = vunpack.c.h.b16 %v1863
    %v2183 = vunpack.c.l.b16 %v1864
    %v2184 = vunpack.c.h.b16 %v1864
    %v2185 = vunpack.c.l.b16 %v1865
    %v2186 = vunpack.c.h.b16 %v1865
    %v2187 = vunpack.c.l.b16 %v1866
    %v2188 = vunpack.c.h.b16 %v1866
    %v2189 = vunpack.c.l.b16 %v1867
    %v2190 = vunpack.c.h.b16 %v1867
    %v2191 = vunpack.c.l.b16 %v1868
    %v2192 = vunpack.c.h.b16 %v1868
    %v2193 = vunpack.c.l.b16 %v1869
    %v2194 = vunpack.c.h.b16 %v1869
    %v2195 = vunpack.c.l.b16 %v1870
    %v2196 = vunpack.c.h.b16 %v1870
    %v2197 = vunpack.c.l.b16 %v1871
    %v2198 = vunpack.c.h.b16 %v1871
    %v2199 = vunpack.c.l.b16 %v1872
    %v2200 = vunpack.c.h.b16 %v1872
    %v2201 = vunpack.c.l.b16 %v1873
    %v2202 = vunpack.c.h.b16 %v1873
    %v2203 = vunpack.c.l.b16 %v1874
    %v2204 = vunpack.c.h.b16 %v1874
    %v2205 = vunpack.c.l.b16 %v1875
    %v2206 = vunpack.c.h.b16 %v1875
    %v2207 = vunpack.c.l.b16 %v1876
    %v2208 = vunpack.c.h.b16 %v1876
    %v2209 = vunpack.c.l.b16 %v1877
    %v2210 = vunpack.c.h.b16 %v1877
    %v2211 = vunpack.c.l.b16 %v1878
    %v2212 = vunpack.c.h.b16 %v1878
    %v2213 = vunpack.c.l.b16 %v1879
    %v2214 = vunpack.c.h.b16 %v1879
    %v2215 = vunpack.c.l.b16 %v1880
    %v2216 = vunpack.c.h.b16 %v1880
    %v2217 = vunpack.c.l.b16 %v1881
    %v2218 = vunpack.c.h.b16 %v1881
    %v2219 = vunpack.c.l.b16 %v1882
    %v2220 = vunpack.c.h.b16 %v1882
    %v2221 = vunpack.c.l.b16 %v1883
    %v2222 = vunpack.c.h.b16 %v1883
    %v2223 = vunpack.c.l.b16 %v1884
    %v2224 = vunpack.c.h.b16 %v1884
    %v2225 = vunpack.c.l.b16 %v1885
    %v2226 = vunpack.c.h.b16 %v1885
    %v2227 = vunpack.c.l.b16 %v1886
    %v2228 = vunpack.c.h.b16 %v1886
    %v2229 = vunpack.c.l.b16 %v1887
    %v2230 = vunpack.c.h.b16 %v1887
    %v2231 = vunpack.c.l.b16 %v1888
    %v2232 = vunpack.c.h.b16 %v1888
    %v2233 = vunpack.c.l.b16 %v1889
    %v2234 = vunpack.c.h.b16 %v1889
    %v2235 = vunpack.c.l.b16 %v1890
    %v2236 = vunpack.c.h.b16 %v1890
    %v2237 = vunpack.c.l.b16 %v1891
    %v2238 = vunpack.c.h.b16 %v1891
    %v2239 = vunpack.c.l.b16 %v1892
    %v2240 = vunpack.c.h.b16 %v1892
    %v2241 = vunpack.c.l.b16 %v1893
    %v2242 = vunpack.c.h.b16 %v1893
    %v2243 = vunpack.c.l.b16 %v1894
    %v2244 = vunpack.c.h.b16 %v1894
    %v2245 = vunpack.c.l.b16 %v1895
    %v2246 = vunpack.c.h.b16 %v1895
    %v2247 = vunpack.c.l.b16 %v1896
    %v2248 = vunpack.c.h.b16 %v1896
    %v2249 = vunpack.c.l.b16 %v1897
    %v2250 = vunpack.c.h.b16 %v1897
    %v2251 = vunpack.c.l.b16 %v1898
    %v2252 = vunpack.c.h.b16 %v1898
    %v2253 = vunpack.c.l.b16 %v1899
    %v2254 = vunpack.c.h.b16 %v1899
    %v2255 = vunpack.c.l.b16 %v1900
    %v2256 = vunpack.c.h.b16 %v1900
    %v2257 = vunpack.c.l.b16 %v1901
    %v2258 = vunpack.c.h.b16 %v1901
    %v2259 = vunpack.c.l.b16 %v1902
    %v2260 = vunpack.c.h.b16 %v1902
    %v2261 = vunpack.c.l.b16 %v1903
    %v2262 = vunpack.c.h.b16 %v1903
    %v2263 = vunpack.c.l.b16 %v1904
    %v2264 = vunpack.c.h.b16 %v1904
    %v2265 = vunpack.c.l.b16 %v1905
    %v2266 = vunpack.c.h.b16 %v1905
    %v2267 = vunpack.c.l.b16 %v1906
    %v2268 = vunpack.c.h.b16 %v1906
    %v2269 = vunpack.c.l.b16 %v1907
    %v2270 = vunpack.c.h.b16 %v1907
    %v2271 = vunpack.c.l.b16 %v1908
    %v2272 = vunpack.c.h.b16 %v1908
    %v2273 = vunpack.c.l.b16 %v1909
    %v2274 = vunpack.c.h.b16 %v1909
    %v2275 = vunpack.c.l.b16 %v1910
    %v2276 = vunpack.c.h.b16 %v1910
    %v2277 = vunpack.c.l.b16 %v1911
    %v2278 = vunpack.c.h.b16 %v1911
    %v2279 = vunpack.c.l.b16 %v1912
    %v2280 = vunpack.c.h.b16 %v1912
    %v2281 = vunpack.c.l.b16 %v1913
    %v2282 = vunpack.c.h.b16 %v1913
    %v2283 = vunpack.c.l.b16 %v1914
    %v2284 = vunpack.c.h.b16 %v1914
    %v2285 = vunpack.c.l.b16 %v1915
    %v2286 = vunpack.c.h.b16 %v1915
    %v2287 = vunpack.c.l.b16 %v1916
    %v2288 = vunpack.c.h.b16 %v1916
    %v2289 = vunpack.c.l.b16 %v1917
    %v2290 = vunpack.c.h.b16 %v1917
    %v2291 = vunpack.c.l.b16 %v1918
    %v2292 = vunpack.c.h.b16 %v1918
    %v2293 = vunpack.c.l.b16 %v1919
    %v2294 = vunpack.c.h.b16 %v1919
    %v2295 = vunpack.c.l.b16 %v1920
    %v2296 = vunpack.c.h.b16 %v1920
    %v2297 = vunpack.c.l.b16 %v1921
    %v2298 = vunpack.c.h.b16 %v1921
    %v2299 = vunpack.c.l.b16 %v1922
    %v2300 = vunpack.c.h.b16 %v1922
    %v2301 = vunpack.c.l.b16 %v1923
    %v2302 = vunpack.c.h.b16 %v1923
    %v2303 = vunpack.c.l.b16 %v1924
    %v2304 = vunpack.c.h.b16 %v1924
    %v2305 = vunpack.c.l.b16 %v1925
    %v2306 = vunpack.c.h.b16 %v1925
    %v2307 = vunpack.c.l.b16 %v1926
    %v2308 = vunpack.c.h.b16 %v1926
    %v2309 = vunpack.c.l.b16 %v1927
    %v2310 = vunpack.c.h.b16 %v1927
    %v2311 = vunpack.c.l.b16 %v1928
    %v2312 = vunpack.c.h.b16 %v1928
    %v2313 = vunpack.c.l.b16 %v1929
    %v2314 = vunpack.c.h.b16 %v1929
    %v2315 = vunpack.c.l.b16 %v1930
    %v2316 = vunpack.c.h.b16 %v1930
    %v2317 = vunpack.c.l.b16 %v1931
    %v2318 = vunpack.c.h.b16 %v1931
    %v2319 = vunpack.c.l.b16 %v1932
    %v2320 = vunpack.c.h.b16 %v1932
    %v2321 = vunpack.c.l.b16 %v1933
    %v2322 = vunpack.c.h.b16 %v1933
    %v2323 = vunpack.c.l.b16 %v1934
    %v2324 = vunpack.c.h.b16 %v1934
    %v2325 = vunpack.c.l.b16 %v1935
    %v2326 = vunpack.c.h.b16 %v1935
    %v2327 = vunpack.c.l.b16 %v1936
    %v2328 = vunpack.c.h.b16 %v1936
    %v2329 = vunpack.c.l.b16 %v1937
    %v2330 = vunpack.c.h.b16 %v1937
    %v2331 = vunpack.c.l.b16 %v1938
    %v2332 = vunpack.c.h.b16 %v1938
    %v2333 = vpack.c.b16 %v2081, %v2077
    %v2334 = vpack.c.b16 %v2082, %v2078
    %v2335 = vpack.c.b16 %v2083, %v2079
    %v2336 = vpack.c.b16 %v2084, %v2080
    %v2337 = vpack.c.b16 %v2089, %v2085
    %v2338 = vpack.c.b16 %v2090, %v2086
    %v2339 = vpack.c.b16 %v2091, %v2087
    %v2340 = vpack.c.b16 %v2092, %v2088
    %v2341 = vpack.c.b16 %v2097, %v2093
    %v2342 = vpack.c.b16 %v2098, %v2094
    %v2343 = vpack.c.b16 %v2099, %v2095
    %v2344 = vpack.c.b16 %v2100, %v2096
    %v2345 = vpack.c.b16 %v2105, %v2101
    %v2346 = vpack.c.b16 %v2106, %v2102
    %v2347 = vpack.c.b16 %v2107, %v2103
    %v2348 = vpack.c.b16 %v2108, %v2104
    %v2349 = vpack.c.b16 %v2113, %v2109
    %v2350 = vpack.c.b16 %v2114, %v2110
    %v2351 = vpack.c.b16 %v2115, %v2111
    %v2352 = vpack.c.b16 %v2116, %v2112
    %v2353 = vpack.c.b16 %v2121, %v2117
    %v2354 = vpack.c.b16 %v2122, %v2118
    %v2355 = vpack.c.b16 %v2123, %v2119
    %v2356 = vpack.c.b16 %v2124, %v2120
    %v2357 = vpack.c.b16 %v2129, %v2125
    %v2358 = vpack.c.b16 %v2130, %v2126
    %v2359 = vpack.c.b16 %v2131, %v2127
    %v2360 = vpack.c.b16 %v2132, %v2128
    %v2361 = vpack.c.b16 %v2137, %v2133
    %v2362 = vpack.c.b16 %v2138, %v2134
    %v2363 = vpack.c.b16 %v2139, %v2135
    %v2364 = vpack.c.b16 %v2140, %v2136
    %v2365 = vpack.c.b16 %v2145, %v2141
    %v2366 = vpack.c.b16 %v2146, %v2142
    %v2367 = vpack.c.b16 %v2147, %v2143
    %v2368 = vpack.c.b16 %v2148, %v2144
    %v2369 = vpack.c.b16 %v2153, %v2149
    %v2370 = vpack.c.b16 %v2154, %v2150
    %v2371 = vpack.c.b16 %v2155, %v2151
    %v2372 = vpack.c.b16 %v2156, %v2152
    %v2373 = vpack.c.b16 %v2161, %v2157
    %v2374 = vpack.c.b16 %v2162, %v2158
    %v2375 = vpack.c.b16 %v2163, %v2159
    %v2376 = vpack.c.b16 %v2164, %v2160
    %v2377 = vpack.c.b16 %v2169, %v2165
    %v2378 = vpack.c.b16 %v2170, %v2166
    %v2379 = vpack.c.b16 %v2171, %v2167
    %v2380 = vpack.c.b16 %v2172, %v2168
    %v2381 = vpack.c.b16 %v2177, %v2173
    %v2382 = vpack.c.b16 %v2178, %v2174
    %v2383 = vpack.c.b16 %v2179, %v2175
    %v2384 = vpack.c.b16 %v2180, %v2176
    %v2385 = vpack.c.b16 %v2185, %v2181
    %v2386 = vpack.c.b16 %v2186, %v2182
    %v2387 = vpack.c.b16 %v2187, %v2183
    %v2388 = vpack.c.b16 %v2188, %v2184
    %v2389 = vpack.c.b16 %v2193, %v2189
    %v2390 = vpack.c.b16 %v2194, %v2190
    %v2391 = vpack.c.b16 %v2195, %v2191
    %v2392 = vpack.c.b16 %v2196, %v2192
    %v2393 = vpack.c.b16 %v2201, %v2197
    %v2394 = vpack.c.b16 %v2202, %v2198
    %v2395 = vpack.c.b16 %v2203, %v2199
    %v2396 = vpack.c.b16 %v2204, %v2200
    %v2397 = vpack.c.b16 %v2209, %v2205
    %v2398 = vpack.c.b16 %v2210, %v2206
    %v2399 = vpack.c.b16 %v2211, %v2207
    %v2400 = vpack.c.b16 %v2212, %v2208
    %v2401 = vpack.c.b16 %v2217, %v2213
    %v2402 = vpack.c.b16 %v2218, %v2214
    %v2403 = vpack.c.b16 %v2219, %v2215
    %v2404 = vpack.c.b16 %v2220, %v2216
    %v2405 = vpack.c.b16 %v2225, %v2221
    %v2406 = vpack.c.b16 %v2226, %v2222
    %v2407 = vpack.c.b16 %v2227, %v2223
    %v2408 = vpack.c.b16 %v2228, %v2224
    %v2409 = vpack.c.b16 %v2233, %v2229
    %v2410 = vpack.c.b16 %v2234, %v2230
    %v2411 = vpack.c.b16 %v2235, %v2231
    %v2412 = vpack.c.b16 %v2236, %v2232
    %v2413 = vpack.c.b16 %v2241, %v2237
    %v2414 = vpack.c.b16 %v2242, %v2238
    %v2415 = vpack.c.b16 %v2243, %v2239
    %v2416 = vpack.c.b16 %v2244, %v2240
    %v2417 = vpack.c.b16 %v2249, %v2245
    %v2418 = vpack.c.b16 %v2250, %v2246
    %v2419 = vpack.c.b16 %v2251, %v2247
    %v2420 = vpack.c.b16 %v2252, %v2248
    %v2421 = vpack.c.b16 %v2257, %v2253
    %v2422 = vpack.c.b16 %v2258, %v2254
    %v2423 = vpack.c.b16 %v2259, %v2255
    %v2424 = vpack.c.b16 %v2260, %v2256
    %v2425 = vpack.c.b16 %v2265, %v2261
    %v2426 = vpack.c.b16 %v2266, %v2262
    %v2427 = vpack.c.b16 %v2267, %v2263
    %v2428 = vpack.c.b16 %v2268, %v2264
    %v2429 = vpack.c.b16 %v2273, %v2269
    %v2430 = vpack.c.b16 %v2274, %v2270
    %v2431 = vpack.c.b16 %v2275, %v2271
    %v2432 = vpack.c.b16 %v2276, %v2272
    %v2433 = vpack.c.b16 %v2281, %v2277
    %v2434 = vpack.c.b16 %v2282, %v2278
    %v2435 = vpack.c.b16 %v2283, %v2279
    %v2436 = vpack.c.b16 %v2284, %v2280
    %v2437 = vpack.c.b16 %v2289, %v2285
    %v2438 = vpack.c.b16 %v2290, %v2286
    %v2439 = vpack.c.b16 %v2291, %v2287
    %v2440 = vpack.c.b16 %v2292, %v2288
    %v2441 = vpack.c.b16 %v2297, %v2293
    %v2442 = vpack.c.b16 %v2298, %v2294
    %v2443 = vpack.c.b16 %v2299, %v2295
    %v2444 = vpack.c.b16 %v2300, %v2296
    %v2445 = vpack.c.b16 %v2305, %v2301
    %v2446 = vpack.c.b16 %v2306, %v2302
    %v2447 = vpack.c.b16 %v2307, %v2303
    %v2448 = vpack.c.b16 %v2308, %v2304
    %v2449 = vpack.c.b16 %v2313, %v2309
    %v2450 = vpack.c.b16 %v2314, %v2310
    %v2451 = vpack.c.b16 %v2315, %v2311
    %v2452 = vpack.c.b16 %v2316, %v2312
    %v2453 = vpack.c.b16 %v2321, %v2317
    %v2454 = vpack.c.b16 %v2322, %v2318
    %v2455 = vpack.c.b16 %v2323, %v2319
    %v2456 = vpack.c.b16 %v2324, %v2320
    %v2457 = vpack.c.b16 %v2329, %v2325
    %v2458 = vpack.c.b16 %v2330, %v2326
    %v2459 = vpack.c.b16 %v2331, %v2327
    %v2460 = vpack.c.b16 %v2332, %v2328
    %2589 = vmatpush.bf16.msra.mxu0 %v2361
    %2590 = vmatpush.bf16.msra.mxu0 %v2357
    %2591 = vmatpush.bf16.msra.mxu0 %v2353
    %2592 = vmatpush.bf16.msra.mxu0 %v2349
    %2593 = vmatpush.bf16.msra.mxu0 %v2345
    %2594 = vmatpush.bf16.msra.mxu0 %v2341
    %2595 = vmatpush.bf16.msra.mxu0 %v2337
    %2596 = vmatpush.bf16.msra.mxu0 %v2333
    %2597 = vmatmul.bf16.gmra.mxu0 %v1807
    %v2598 = vpop.f32.mrf.mxu0
    %v2599 = vadd.f32 %v1941, %v2598
    %v2600 = vpop.f32.mrf.mxu0
    %2601 = vdwg.mxu0
    %2602 = vmatpush.bf16.msra.mxu0 %v2393
    %2603 = vmatpush.bf16.msra.mxu0 %v2389
    %2604 = vmatpush.bf16.msra.mxu0 %v2385
    %2605 = vmatpush.bf16.msra.mxu0 %v2381
    %2606 = vmatpush.bf16.msra.mxu0 %v2377
    %2607 = vmatpush.bf16.msra.mxu0 %v2373
    %2608 = vmatpush.bf16.msra.mxu0 %v2369
    %2609 = vmatpush.bf16.msra.mxu0 %v2365
    %2610 = vmatmul.bf16.gmra.mxu0 %v1808
    %v2611 = vpop.f32.mrf.mxu0
    %v2612 = vadd.f32 %v2599, %v2611
    %v2613 = vpop.f32.mrf.mxu0
    %2614 = vdwg.mxu0
    %2615 = vmatpush.bf16.msra.mxu0 %v2425
    %2616 = vmatpush.bf16.msra.mxu0 %v2421
    %2617 = vmatpush.bf16.msra.mxu0 %v2417
    %2618 = vmatpush.bf16.msra.mxu0 %v2413
    %2619 = vmatpush.bf16.msra.mxu0 %v2409
    %2620 = vmatpush.bf16.msra.mxu0 %v2405
    %2621 = vmatpush.bf16.msra.mxu0 %v2401
    %2622 = vmatpush.bf16.msra.mxu0 %v2397
    %2623 = vmatmul.bf16.gmra.mxu0 %v1809
    %v2624 = vpop.f32.mrf.mxu0
    %v2625 = vadd.f32 %v2612, %v2624
    %v2626 = vpop.f32.mrf.mxu0
    %2627 = vdwg.mxu0
    %2628 = vmatpush.bf16.msra.mxu0 %v2457
    %2629 = vmatpush.bf16.msra.mxu0 %v2453
    %2630 = vmatpush.bf16.msra.mxu0 %v2449
    %2631 = vmatpush.bf16.msra.mxu0 %v2445
    %2632 = vmatpush.bf16.msra.mxu0 %v2441
    %2633 = vmatpush.bf16.msra.mxu0 %v2437
    %2634 = vmatpush.bf16.msra.mxu0 %v2433
    %2635 = vmatpush.bf16.msra.mxu0 %v2429
    %2636 = vmatmul.bf16.gmra.mxu0 %v1810
    %v2637 = vpop.f32.mrf.mxu0
    %v2638 = vadd.f32 %v2625, %v2637
    %v2639 = vpop.f32.mrf.mxu0
    %2640 = vdwg.mxu0
    %2641 = vmatpush.bf16.msra.mxu0 %v2362
    %2642 = vmatpush.bf16.msra.mxu0 %v2358
    %2643 = vmatpush.bf16.msra.mxu0 %v2354
    %2644 = vmatpush.bf16.msra.mxu0 %v2350
    %2645 = vmatpush.bf16.msra.mxu0 %v2346
    %2646 = vmatpush.bf16.msra.mxu0 %v2342
    %2647 = vmatpush.bf16.msra.mxu0 %v2338
    %2648 = vmatpush.bf16.msra.mxu0 %v2334
    %2649 = vmatmul.bf16.gmra.mxu0 %v1807
    %v2650 = vpop.f32.mrf.mxu0
    %v2651 = vadd.f32 %v1942, %v2650
    %v2652 = vpop.f32.mrf.mxu0
    %2653 = vdwg.mxu0
    %2654 = vmatpush.bf16.msra.mxu0 %v2394
    %2655 = vmatpush.bf16.msra.mxu0 %v2390
    %2656 = vmatpush.bf16.msra.mxu0 %v2386
    %2657 = vmatpush.bf16.msra.mxu0 %v2382
    %2658 = vmatpush.bf16.msra.mxu0 %v2378
    %2659 = vmatpush.bf16.msra.mxu0 %v2374
    %2660 = vmatpush.bf16.msra.mxu0 %v2370
    %2661 = vmatpush.bf16.msra.mxu0 %v2366
    %2662 = vmatmul.bf16.gmra.mxu0 %v1808
    %v2663 = vpop.f32.mrf.mxu0
    %v2664 = vadd.f32 %v2651, %v2663
    %v2665 = vpop.f32.mrf.mxu0
    %2666 = vdwg.mxu0
    %2667 = vmatpush.bf16.msra.mxu0 %v2426
    %2668 = vmatpush.bf16.msra.mxu0 %v2422
    %2669 = vmatpush.bf16.msra.mxu0 %v2418
    %2670 = vmatpush.bf16.msra.mxu0 %v2414
    %2671 = vmatpush.bf16.msra.mxu0 %v2410
    %2672 = vmatpush.bf16.msra.mxu0 %v2406
    %2673 = vmatpush.bf16.msra.mxu0 %v2402
    %2674 = vmatpush.bf16.msra.mxu0 %v2398
    %2675 = vmatmul.bf16.gmra.mxu0 %v1809
    %v2676 = vpop.f32.mrf.mxu0
    %v2677 = vadd.f32 %v2664, %v2676
    %v2678 = vpop.f32.mrf.mxu0
    %2679 = vdwg.mxu0
    %2680 = vmatpush.bf16.msra.mxu0 %v2458
    %2681 = vmatpush.bf16.msra.mxu0 %v2454
    %2682 = vmatpush.bf16.msra.mxu0 %v2450
    %2683 = vmatpush.bf16.msra.mxu0 %v2446
    %2684 = vmatpush.bf16.msra.mxu0 %v2442
    %2685 = vmatpush.bf16.msra.mxu0 %v2438
    %2686 = vmatpush.bf16.msra.mxu0 %v2434
    %2687 = vmatpush.bf16.msra.mxu0 %v2430
    %2688 = vmatmul.bf16.gmra.mxu0 %v1810
    %v2689 = vpop.f32.mrf.mxu0
    %v2690 = vadd.f32 %v2677, %v2689
    %v2691 = vpop.f32.mrf.mxu0
    %2692 = vdwg.mxu0
    %2693 = vmatpush.bf16.msra.mxu0 %v2363
    %2694 = vmatpush.bf16.msra.mxu0 %v2359
    %2695 = vmatpush.bf16.msra.mxu0 %v2355
    %2696 = vmatpush.bf16.msra.mxu0 %v2351
    %2697 = vmatpush.bf16.msra.mxu0 %v2347
    %2698 = vmatpush.bf16.msra.mxu0 %v2343
    %2699 = vmatpush.bf16.msra.mxu0 %v2339
    %2700 = vmatpush.bf16.msra.mxu0 %v2335
    %2701 = vmatmul.bf16.gmra.mxu0 %v1807
    %v2702 = vpop.f32.mrf.mxu0
    %v2703 = vadd.f32 %v1943, %v2702
    %v2704 = vpop.f32.mrf.mxu0
    %2705 = vdwg.mxu0
    %2706 = vmatpush.bf16.msra.mxu0 %v2395
    %2707 = vmatpush.bf16.msra.mxu0 %v2391
    %2708 = vmatpush.bf16.msra.mxu0 %v2387
    %2709 = vmatpush.bf16.msra.mxu0 %v2383
    %2710 = vmatpush.bf16.msra.mxu0 %v2379
    %2711 = vmatpush.bf16.msra.mxu0 %v2375
    %2712 = vmatpush.bf16.msra.mxu0 %v2371
    %2713 = vmatpush.bf16.msra.mxu0 %v2367
    %2714 = vmatmul.bf16.gmra.mxu0 %v1808
    %v2715 = vpop.f32.mrf.mxu0
    %v2716 = vadd.f32 %v2703, %v2715
    %v2717 = vpop.f32.mrf.mxu0
    %2718 = vdwg.mxu0
    %2719 = vmatpush.bf16.msra.mxu0 %v2427
    %2720 = vmatpush.bf16.msra.mxu0 %v2423
    %2721 = vmatpush.bf16.msra.mxu0 %v2419
    %2722 = vmatpush.bf16.msra.mxu0 %v2415
    %2723 = vmatpush.bf16.msra.mxu0 %v2411
    %2724 = vmatpush.bf16.msra.mxu0 %v2407
    %2725 = vmatpush.bf16.msra.mxu0 %v2403
    %2726 = vmatpush.bf16.msra.mxu0 %v2399
    %2727 = vmatmul.bf16.gmra.mxu0 %v1809
    %v2728 = vpop.f32.mrf.mxu0
    %v2729 = vadd.f32 %v2716, %v2728
    %v2730 = vpop.f32.mrf.mxu0
    %2731 = vdwg.mxu0
    %2732 = vmatpush.bf16.msra.mxu0 %v2459
    %2733 = vmatpush.bf16.msra.mxu0 %v2455
    %2734 = vmatpush.bf16.msra.mxu0 %v2451
    %2735 = vmatpush.bf16.msra.mxu0 %v2447
    %2736 = vmatpush.bf16.msra.mxu0 %v2443
    %2737 = vmatpush.bf16.msra.mxu0 %v2439
    %2738 = vmatpush.bf16.msra.mxu0 %v2435
    %2739 = vmatpush.bf16.msra.mxu0 %v2431
    %2740 = vmatmul.bf16.gmra.mxu0 %v1810
    %v2741 = vpop.f32.mrf.mxu0
    %v2742 = vadd.f32 %v2729, %v2741
    %v2743 = vpop.f32.mrf.mxu0
    %2744 = vdwg.mxu0
    %2745 = vmatpush.bf16.msra.mxu0 %v2364
    %2746 = vmatpush.bf16.msra.mxu0 %v2360
    %2747 = vmatpush.bf16.msra.mxu0 %v2356
    %2748 = vmatpush.bf16.msra.mxu0 %v2352
    %2749 = vmatpush.bf16.msra.mxu0 %v2348
    %2750 = vmatpush.bf16.msra.mxu0 %v2344
    %2751 = vmatpush.bf16.msra.mxu0 %v2340
    %2752 = vmatpush.bf16.msra.mxu0 %v2336
    %2753 = vmatmul.bf16.gmra.mxu0 %v1807
    %v2754 = vpop.f32.mrf.mxu0
    %v2755 = vadd.f32 %v1944, %v2754
    %v2756 = vpop.f32.mrf.mxu0
    %2757 = vdwg.mxu0
    %2758 = vmatpush.bf16.msra.mxu0 %v2396
    %2759 = vmatpush.bf16.msra.mxu0 %v2392
    %2760 = vmatpush.bf16.msra.mxu0 %v2388
    %2761 = vmatpush.bf16.msra.mxu0 %v2384
    %2762 = vmatpush.bf16.msra.mxu0 %v2380
    %2763 = vmatpush.bf16.msra.mxu0 %v2376
    %2764 = vmatpush.bf16.msra.mxu0 %v2372
    %2765 = vmatpush.bf16.msra.mxu0 %v2368
    %2766 = vmatmul.bf16.gmra.mxu0 %v1808
    %v2767 = vpop.f32.mrf.mxu0
    %v2768 = vadd.f32 %v2755, %v2767
    %v2769 = vpop.f32.mrf.mxu0
    %2770 = vdwg.mxu0
    %2771 = vmatpush.bf16.msra.mxu0 %v2428
    %2772 = vmatpush.bf16.msra.mxu0 %v2424
    %2773 = vmatpush.bf16.msra.mxu0 %v2420
    %2774 = vmatpush.bf16.msra.mxu0 %v2416
    %2775 = vmatpush.bf16.msra.mxu0 %v2412
    %2776 = vmatpush.bf16.msra.mxu0 %v2408
    %2777 = vmatpush.bf16.msra.mxu0 %v2404
    %2778 = vmatpush.bf16.msra.mxu0 %v2400
    %2779 = vmatmul.bf16.gmra.mxu0 %v1809
    %v2780 = vpop.f32.mrf.mxu0
    %v2781 = vadd.f32 %v2768, %v2780
    %v2782 = vpop.f32.mrf.mxu0
    %2783 = vdwg.mxu0
    %2784 = vmatpush.bf16.msra.mxu0 %v2460
    %2785 = vmatpush.bf16.msra.mxu0 %v2456
    %2786 = vmatpush.bf16.msra.mxu0 %v2452
    %2787 = vmatpush.bf16.msra.mxu0 %v2448
    %2788 = vmatpush.bf16.msra.mxu0 %v2444
    %2789 = vmatpush.bf16.msra.mxu0 %v2440
    %2790 = vmatpush.bf16.msra.mxu0 %v2436
    %2791 = vmatpush.bf16.msra.mxu0 %v2432
    %2792 = vmatmul.bf16.gmra.mxu0 %v1810
    %v2793 = vpop.f32.mrf.mxu0
    %v2794 = vadd.f32 %v2781, %v2793
    %v2795 = vpop.f32.mrf.mxu0
    %2796 = vdwg.mxu0
    %v2797 = vmax.f32 %v2638, 0.0
    %v2798 = vmax.f32 %v2690, 0.0
    %v2799 = vmax.f32 %v2742, 0.0
    %v2800 = vmax.f32 %v2794, 0.0
    %v2801 = vpack.c.bf16 %v2797, %v2797
    %v2802 = vpack.c.bf16 %v2798, %v2798
    %v2803 = vpack.c.bf16 %v2799, %v2799
    %v2804 = vpack.c.bf16 %v2800, %v2800
    %v2805 = vld [vmem:[%s7] sm:$0xf]
    %v2806 = vld [vmem:[%s7 + $0x4] sm:$0xf]
    %v2807 = vld [vmem:[%s7 + $0x8] sm:$0xf]
    %v2808 = vld [vmem:[%s7 + $0xc] sm:$0xf]
    %v2809 = vld [vmem:[%s7 + $0x10] sm:$0xf]
    %v2810 = vld [vmem:[%s7 + $0x14] sm:$0xf]
    %v2811 = vld [vmem:[%s7 + $0x18] sm:$0xf]
    %v2812 = vld [vmem:[%s7 + $0x1c] sm:$0xf]
    %v2813 = vld [vmem:[%s7 + $0x20] sm:$0xf]
    %v2814 = vld [vmem:[%s7 + $0x24] sm:$0xf]
    %v2815 = vld [vmem:[%s7 + $0x28] sm:$0xf]
    %v2816 = vld [vmem:[%s7 + $0x2c] sm:$0xf]
    %v2817 = vld [vmem:[%s7 + $0x30] sm:$0xf]
    %v2818 = vld [vmem:[%s7 + $0x34] sm:$0xf]
    %v2819 = vld [vmem:[%s7 + $0x38] sm:$0xf]
    %v2820 = vld [vmem:[%s7 + $0x3c] sm:$0xf]
    %v2821 = vld [vmem:[%s7 + $0x40] sm:$0xf]
    %v2822 = vld [vmem:[%s7 + $0x44] sm:$0xf]
    %v2823 = vld [vmem:[%s7 + $0x48] sm:$0xf]
    %v2824 = vld [vmem:[%s7 + $0x4c] sm:$0xf]
    %v2825 = vld [vmem:[%s7 + $0x50] sm:$0xf]
    %v2826 = vld [vmem:[%s7 + $0x54] sm:$0xf]
    %v2827 = vld [vmem:[%s7 + $0x58] sm:$0xf]
    %v2828 = vld [vmem:[%s7 + $0x5c] sm:$0xf]
    %v2829 = vld [vmem:[%s7 + $0x60] sm:$0xf]
    %v2830 = vld [vmem:[%s7 + $0x64] sm:$0xf]
    %v2831 = vld [vmem:[%s7 + $0x68] sm:$0xf]
    %v2832 = vld [vmem:[%s7 + $0x6c] sm:$0xf]
    %v2833 = vld [vmem:[%s7 + $0x70] sm:$0xf]
    %v2834 = vld [vmem:[%s7 + $0x74] sm:$0xf]
    %v2835 = vld [vmem:[%s7 + $0x78] sm:$0xf]
    %v2836 = vld [vmem:[%s7 + $0x7c] sm:$0xf]
    %v2837 = vld [vmem:[%s7 + $0x80] sm:$0xf]
    %v2838 = vld [vmem:[%s7 + $0x84] sm:$0xf]
    %v2839 = vld [vmem:[%s7 + $0x88] sm:$0xf]
    %v2840 = vld [vmem:[%s7 + $0x8c] sm:$0xf]
    %v2841 = vld [vmem:[%s7 + $0x90] sm:$0xf]
    %v2842 = vld [vmem:[%s7 + $0x94] sm:$0xf]
    %v2843 = vld [vmem:[%s7 + $0x98] sm:$0xf]
    %v2844 = vld [vmem:[%s7 + $0x9c] sm:$0xf]
    %v2845 = vld [vmem:[%s7 + $0xa0] sm:$0xf]
    %v2846 = vld [vmem:[%s7 + $0xa4] sm:$0xf]
    %v2847 = vld [vmem:[%s7 + $0xa8] sm:$0xf]
    %v2848 = vld [vmem:[%s7 + $0xac] sm:$0xf]
    %v2849 = vld [vmem:[%s7 + $0xb0] sm:$0xf]
    %v2850 = vld [vmem:[%s7 + $0xb4] sm:$0xf]
    %v2851 = vld [vmem:[%s7 + $0xb8] sm:$0xf]
    %v2852 = vld [vmem:[%s7 + $0xbc] sm:$0xf]
    %v2853 = vld [vmem:[%s7 + $0xc0] sm:$0xf]
    %v2854 = vld [vmem:[%s7 + $0xc4] sm:$0xf]
    %v2855 = vld [vmem:[%s7 + $0xc8] sm:$0xf]
    %v2856 = vld [vmem:[%s7 + $0xcc] sm:$0xf]
    %v2857 = vld [vmem:[%s7 + $0xd0] sm:$0xf]
    %v2858 = vld [vmem:[%s7 + $0xd4] sm:$0xf]
    %v2859 = vld [vmem:[%s7 + $0xd8] sm:$0xf]
    %v2860 = vld [vmem:[%s7 + $0xdc] sm:$0xf]
    %v2861 = vld [vmem:[%s7 + $0xe0] sm:$0xf]
    %v2862 = vld [vmem:[%s7 + $0xe4] sm:$0xf]
    %v2863 = vld [vmem:[%s7 + $0xe8] sm:$0xf]
    %v2864 = vld [vmem:[%s7 + $0xec] sm:$0xf]
    %v2865 = vld [vmem:[%s7 + $0xf0] sm:$0xf]
    %v2866 = vld [vmem:[%s7 + $0xf4] sm:$0xf]
    %v2867 = vld [vmem:[%s7 + $0xf8] sm:$0xf]
    %v2868 = vld [vmem:[%s7 + $0xfc] sm:$0xf]
    %v2869 = vld [vmem:[%s8] sm:$0x1]
    %v2871 = vperm.slane %v2869, 0
    %v2937 = vunpack.c.l.b16 %v2805
    %v2938 = vunpack.c.l.b16 %v2806
    %v2939 = vunpack.c.l.b16 %v2807
    %v2940 = vunpack.c.l.b16 %v2808
    %v2941 = vunpack.c.l.b16 %v2809
    %v2942 = vunpack.c.l.b16 %v2810
    %v2943 = vunpack.c.l.b16 %v2811
    %v2944 = vunpack.c.l.b16 %v2812
    %v2945 = vunpack.c.l.b16 %v2813
    %v2946 = vunpack.c.l.b16 %v2814
    %v2947 = vunpack.c.l.b16 %v2815
    %v2948 = vunpack.c.l.b16 %v2816
    %v2949 = vunpack.c.l.b16 %v2817
    %v2950 = vunpack.c.l.b16 %v2818
    %v2951 = vunpack.c.l.b16 %v2819
    %v2952 = vunpack.c.l.b16 %v2820
    %v2953 = vunpack.c.l.b16 %v2821
    %v2954 = vunpack.c.l.b16 %v2822
    %v2955 = vunpack.c.l.b16 %v2823
    %v2956 = vunpack.c.l.b16 %v2824
    %v2957 = vunpack.c.l.b16 %v2825
    %v2958 = vunpack.c.l.b16 %v2826
    %v2959 = vunpack.c.l.b16 %v2827
    %v2960 = vunpack.c.l.b16 %v2828
    %v2961 = vunpack.c.l.b16 %v2829
    %v2962 = vunpack.c.l.b16 %v2830
    %v2963 = vunpack.c.l.b16 %v2831
    %v2964 = vunpack.c.l.b16 %v2832
    %v2965 = vunpack.c.l.b16 %v2833
    %v2966 = vunpack.c.l.b16 %v2834
    %v2967 = vunpack.c.l.b16 %v2835
    %v2968 = vunpack.c.l.b16 %v2836
    %v2969 = vunpack.c.l.b16 %v2837
    %v2970 = vunpack.c.l.b16 %v2838
    %v2971 = vunpack.c.l.b16 %v2839
    %v2972 = vunpack.c.l.b16 %v2840
    %v2973 = vunpack.c.l.b16 %v2841
    %v2974 = vunpack.c.l.b16 %v2842
    %v2975 = vunpack.c.l.b16 %v2843
    %v2976 = vunpack.c.l.b16 %v2844
    %v2977 = vunpack.c.l.b16 %v2845
    %v2978 = vunpack.c.l.b16 %v2846
    %v2979 = vunpack.c.l.b16 %v2847
    %v2980 = vunpack.c.l.b16 %v2848
    %v2981 = vunpack.c.l.b16 %v2849
    %v2982 = vunpack.c.l.b16 %v2850
    %v2983 = vunpack.c.l.b16 %v2851
    %v2984 = vunpack.c.l.b16 %v2852
    %v2985 = vunpack.c.l.b16 %v2853
    %v2986 = vunpack.c.l.b16 %v2854
    %v2987 = vunpack.c.l.b16 %v2855
    %v2988 = vunpack.c.l.b16 %v2856
    %v2989 = vunpack.c.l.b16 %v2857
    %v2990 = vunpack.c.l.b16 %v2858
    %v2991 = vunpack.c.l.b16 %v2859
    %v2992 = vunpack.c.l.b16 %v2860
    %v2993 = vunpack.c.l.b16 %v2861
    %v2994 = vunpack.c.l.b16 %v2862
    %v2995 = vunpack.c.l.b16 %v2863
    %v2996 = vunpack.c.l.b16 %v2864
    %v2997 = vunpack.c.l.b16 %v2865
    %v2998 = vunpack.c.l.b16 %v2866
    %v2999 = vunpack.c.l.b16 %v2867
    %v3000 = vunpack.c.l.b16 %v2868
    %v3001 = vpack.c.b16 %v2938, %v2937
    %v3002 = vpack.c.b16 %v2940, %v2939
    %v3003 = vpack.c.b16 %v2942, %v2941
    %v3004 = vpack.c.b16 %v2944, %v2943
    %v3005 = vpack.c.b16 %v2946, %v2945
    %v3006 = vpack.c.b16 %v2948, %v2947
    %v3007 = vpack.c.b16 %v2950, %v2949
    %v3008 = vpack.c.b16 %v2952, %v2951
    %v3009 = vpack.c.b16 %v2954, %v2953
    %v3010 = vpack.c.b16 %v2956, %v2955
    %v3011 = vpack.c.b16 %v2958, %v2957
    %v3012 = vpack.c.b16 %v2960, %v2959
    %v3013 = vpack.c.b16 %v2962, %v2961
    %v3014 = vpack.c.b16 %v2964, %v2963
    %v3015 = vpack.c.b16 %v2966, %v2965
    %v3016 = vpack.c.b16 %v2968, %v2967
    %v3017 = vpack.c.b16 %v2970, %v2969
    %v3018 = vpack.c.b16 %v2972, %v2971
    %v3019 = vpack.c.b16 %v2974, %v2973
    %v3020 = vpack.c.b16 %v2976, %v2975
    %v3021 = vpack.c.b16 %v2978, %v2977
    %v3022 = vpack.c.b16 %v2980, %v2979
    %v3023 = vpack.c.b16 %v2982, %v2981
    %v3024 = vpack.c.b16 %v2984, %v2983
    %v3025 = vpack.c.b16 %v2986, %v2985
    %v3026 = vpack.c.b16 %v2988, %v2987
    %v3027 = vpack.c.b16 %v2990, %v2989
    %v3028 = vpack.c.b16 %v2992, %v2991
    %v3029 = vpack.c.b16 %v2994, %v2993
    %v3030 = vpack.c.b16 %v2996, %v2995
    %v3031 = vpack.c.b16 %v2998, %v2997
    %v3032 = vpack.c.b16 %v3000, %v2999
    %3065 = vmatpush.bf16.msra.mxu0 %v3008
    %3066 = vmatpush.bf16.msra.mxu0 %v3007
    %3067 = vmatpush.bf16.msra.mxu0 %v3006
    %3068 = vmatpush.bf16.msra.mxu0 %v3005
    %3069 = vmatpush.bf16.msra.mxu0 %v3004
    %3070 = vmatpush.bf16.msra.mxu0 %v3003
    %3071 = vmatpush.bf16.msra.mxu0 %v3002
    %3072 = vmatpush.bf16.msra.mxu0 %v3001
    %3073 = vmatmul.bf16.gmra.mxu0 %v2801
    %v3074 = vpop.f32.mrf.mxu0
    %v3075 = vadd.f32 %v2871, %v3074
    %v3076 = vpop.f32.mrf.mxu0
    %3077 = vdwg.mxu0
    %3078 = vmatpush.bf16.msra.mxu0 %v3016
    %3079 = vmatpush.bf16.msra.mxu0 %v3015
    %3080 = vmatpush.bf16.msra.mxu0 %v3014
    %3081 = vmatpush.bf16.msra.mxu0 %v3013
    %3082 = vmatpush.bf16.msra.mxu0 %v3012
    %3083 = vmatpush.bf16.msra.mxu0 %v3011
    %3084 = vmatpush.bf16.msra.mxu0 %v3010
    %3085 = vmatpush.bf16.msra.mxu0 %v3009
    %3086 = vmatmul.bf16.gmra.mxu0 %v2802
    %v3087 = vpop.f32.mrf.mxu0
    %v3088 = vadd.f32 %v3075, %v3087
    %v3089 = vpop.f32.mrf.mxu0
    %3090 = vdwg.mxu0
    %3091 = vmatpush.bf16.msra.mxu0 %v3024
    %3092 = vmatpush.bf16.msra.mxu0 %v3023
    %3093 = vmatpush.bf16.msra.mxu0 %v3022
    %3094 = vmatpush.bf16.msra.mxu0 %v3021
    %3095 = vmatpush.bf16.msra.mxu0 %v3020
    %3096 = vmatpush.bf16.msra.mxu0 %v3019
    %3097 = vmatpush.bf16.msra.mxu0 %v3018
    %3098 = vmatpush.bf16.msra.mxu0 %v3017
    %3099 = vmatmul.bf16.gmra.mxu0 %v2803
    %v3100 = vpop.f32.mrf.mxu0
    %v3101 = vadd.f32 %v3088, %v3100
    %v3102 = vpop.f32.mrf.mxu0
    %3103 = vdwg.mxu0
    %3104 = vmatpush.bf16.msra.mxu0 %v3032
    %3105 = vmatpush.bf16.msra.mxu0 %v3031
    %3106 = vmatpush.bf16.msra.mxu0 %v3030
    %3107 = vmatpush.bf16.msra.mxu0 %v3029
    %3108 = vmatpush.bf16.msra.mxu0 %v3028
    %3109 = vmatpush.bf16.msra.mxu0 %v3027
    %3110 = vmatpush.bf16.msra.mxu0 %v3026
    %3111 = vmatpush.bf16.msra.mxu0 %v3025
    %3112 = vmatmul.bf16.gmra.mxu0 %v2804
    %v3113 = vpop.f32.mrf.mxu0
    %v3114 = vadd.f32 %v3101, %v3113
    %v3115 = vpop.f32.mrf.mxu0
    %3116 = vdwg.mxu0
    %vm3117 = vcmask 48128
    %3118 = vst.msk [vmem:[#allocation8] sm:$0xff] %vm3117, %v3114
    // Predicated region
    $region50: #{dqn_forward.1} parent=1 // pred_check
      _
    $region51: #{dqn_forward.1} parent=1 // pred_check_branch
      %3120 = sbr.rel (0) target = $region53
    $region52: #{dqn_forward.1} parent=1 // pred_region
      %3122 = vsyncadd [#allocation4], 0
      %s3124 = sshll.u32 [#allocation8], 4
      %s3125 = int_to_ptr.vmem [resolvable:$true] %s3124
      %s3126 = sshll.u32 %s9, 4
      %s3127 = int_to_ptr.hbm [resolvable:$true] %s3126
      %3129 = dma.vmem_to_hbm [thread:$0]  %s3125, 128, %s3127, [#allocation4]
    $region53: #{dqn_forward.1} parent=1 // pred_fallthru
      _
    // Predicated region
    $region54: #{dqn_forward.1} parent=1 // pred_check
      _
    $region55: #{dqn_forward.1} parent=1 // pred_check_branch
      %3131 = sbr.rel (0) target = $region57
    $region56: #{dqn_forward.1} parent=1 // pred_region
      %3133 = dma.done [#allocation4], 128
    $region57: #{dqn_forward.1} parent=1 // pred_fallthru
      _
    %3134 = vsyncpa [#allocation3], 1
    %3135 = vsyncpa [#allocation6], 1
    %3136 = vsyncpa [#allocation4], 1

</llo_original>
